<compile_context>
chip_gen: v7x
topology: tpu7x:2x2x1
jax: 0.10.0
libtpu: 0.0.40
codegen_flags: <defaults>
</compile_context>

<pallas_src>
import functools

import jax
import jax.numpy as jnp
from jax.experimental import pallas as pl
from jax.experimental.pallas import tpu as pltpu


def _fpe_kernel(x_ref, w_ref, params_ref, p_ref, o_ref, *,
                eps, lw, inv_cout, compute_dtype):
    """One (row-tile, width-tile) grid step: fused conv+mean matmul + LayerNorm."""
    # Single MXU pass: columns = [y_kh0 | y_kh1 | mean_kh0 | mean_kh1].
    xb = x_ref[...].astype(compute_dtype)                          # (tn, Lw)
    y_all = jnp.dot(xb, w_ref[...], preferred_element_type=jnp.float32)
    y_all = y_all + params_ref[0:1, :]                             # + [bias|bias|b_mean|b_mean]

    gamma = params_ref[1:2, 0:lw]                                  # (1, Lw) f32
    beta = params_ref[1:2, lw:2 * lw]                              # (1, Lw) f32
    p = p_ref[...]                                                 # (Lw, Lw) block-diag ones

    for kh in range(2):                                            # static unroll
        y = y_all[:, kh * lw:(kh + 1) * lw]                        # (tn, Lw) f32
        m = y_all[:, (2 + kh) * lw:(3 + kh) * lw]                  # per-group mean, replicated
        d = y - m
        # Centered variance via one group-sum matmul (avoids sub-128-lane reductions).
        ssq = jnp.dot((d * d).astype(compute_dtype), p,
                      preferred_element_type=jnp.float32)
        z = d * jax.lax.rsqrt(ssq * inv_cout + eps)
        o_ref[:, kh, :] = (z * gamma + beta).astype(o_ref.dtype)


def _round_up(x, m):
    return (x + m - 1) // m * m


def _pick_width_tile(w, c):
    # smallest divisor tw of W with lane-dense blocks: (tw*C) % 128 == 0
    for d in range(1, w + 1):
        if w % d == 0 and (d * c) % 128 == 0:
            return d
    return None


def _pick_row_tile(n, target):
    # largest multiple-of-8 divisor of n that is <= target (0 if none)
    best = 0
    d = 8
    while d <= min(n, target):
        if n % d == 0:
            best = d
        d += 8
    return best


def final_patch_expansion(x, weight, bias, gamma, beta, *, eps=1e-5,
                          row_tile=256, compute_dtype=jnp.bfloat16):
    """x: (B,H,W,C); weight: (C, C//2, 2, 2) torch ConvTranspose2d layout;
    bias/gamma/beta: (C//2,).  Returns (B, 2H, 2W, C//2) in x.dtype."""
    B, H, W, C = x.shape
    assert C % 2 == 0
    Cout = C // 2
    N = B * H

    tw = _pick_width_tile(W, C)
    assert tw is not None, "need a divisor tw of W with (tw*C) % 128 == 0"
    Lw = tw * C                     # == tw * 2 * Cout lanes per (w-tile, kh) scanline slab
    Tw = W // tw

    # Bounded row tile (never fall back to tn=N): pad rows if no clean divisor.
    tn = _pick_row_tile(N, row_tile)
    if tn == 0:
        tn = min(row_tile, _round_up(N, 8))
    Np = _round_up(N, tn)
    Tn = Np // tn

    f32 = jnp.float32
    out_dtype = x.dtype

    # Free row-major view; NO dtype cast here (avoids an extra HBM pass).
    x2 = x.reshape(N, W * C)
    if Np != N:
        x2 = jnp.pad(x2, ((0, Np - N), (0, 0)))

    # ---- pack weights (f32 math in the wrapper, one cast to compute_dtype) ----
    wd = jnp.transpose(weight.astype(f32), (0, 2, 3, 1))           # (C, kh, kw, Cout)
    eye_tw = jnp.eye(tw, dtype=f32)
    blocks = []
    for kh in range(2):                                            # conv blocks
        blocks.append(jnp.kron(eye_tw, wd[:, kh].reshape(C, 2 * Cout)))        # (Lw, Lw)
    for kh in range(2):                                            # folded group-mean blocks
        wm = jnp.mean(wd[:, kh], axis=-1, keepdims=True)                        # (C, 2, 1)
        wm = jnp.broadcast_to(wm, (C, 2, Cout)).reshape(C, 2 * Cout)
        blocks.append(jnp.kron(eye_tw, wm))                                     # (Lw, Lw)
    w_all = jnp.concatenate(blocks, axis=1).astype(compute_dtype)               # (Lw, 4*Lw)

    # One resident (2, 4*Lw) param array: row0 = bias for [y0|y1] + mean(bias) for [m0|m1];
    # row1 = [gamma | beta | 0] (same tiling for both kh halves).
    bias_f = bias.astype(f32)
    row0 = jnp.concatenate([jnp.tile(bias_f, 4 * tw),
                            jnp.full((2 * Lw,), jnp.mean(bias_f), f32)])
    row1 = jnp.concatenate([jnp.tile(gamma.astype(f32), 2 * tw),
                            jnp.tile(beta.astype(f32), 2 * tw),
                            jnp.zeros((2 * Lw,), f32)])
    params = jnp.stack([row0, row1], axis=0)                                     # (2, 4*Lw)

    # Group-SUM projection (block diag of ones -> exact in bf16); 1/Cout is applied in f32.
    p_sum = jnp.kron(jnp.eye(2 * tw, dtype=f32),
                     jnp.ones((Cout, Cout), f32)).astype(compute_dtype)          # (Lw, Lw)

    kernel = functools.partial(_fpe_kernel, eps=float(eps), lw=Lw,
                               inv_cout=1.0 / Cout, compute_dtype=compute_dtype)

    flops = 12 * Np * Tw * Lw * Lw                     # main (8) + 2 stats (4) matmuls per tile
    bytes_acc = (Np * W * C * x2.dtype.itemsize
                 + Np * 2 * W * C * jnp.dtype(out_dtype).itemsize
                 + w_all.size * w_all.dtype.itemsize)
    cost = pl.CostEstimate(flops=int(flops),
                           transcendentals=int(2 * Np * W * C),
                           bytes_accessed=int(bytes_acc))

    out = pl.pallas_call(
        kernel,
        out_shape=jax.ShapeDtypeStruct((Np, 2, W * C), out_dtype),
        grid_spec=pltpu.PrefetchScalarGridSpec(
            num_scalar_prefetch=0,
            grid=(Tn, Tw),
            in_specs=[
                # activations: one lane-dense (tn, Lw) block per step
                pl.BlockSpec((tn, Lw), lambda t, wt: (t, wt)),
                # fused conv + mean weights: constant index -> VMEM-resident
                pl.BlockSpec((Lw, 4 * Lw), lambda t, wt: (0, 0)),
                # bias / gamma / beta packed into one small resident array
                pl.BlockSpec((2, 4 * Lw), lambda t, wt: (0, 0)),
                # group-sum projection, resident
                pl.BlockSpec((Lw, Lw), lambda t, wt: (0, 0)),
            ],
            # each step stores both scanline parities as one (tn, 2, Lw) slab
            out_specs=pl.BlockSpec((tn, 2, Lw), lambda t, wt: (t, 0, wt)),
        ),
        compiler_params=pltpu.CompilerParams(
            dimension_semantics=("parallel", "parallel"),
            vmem_limit_bytes=48 * 1024 * 1024),        # sized to fit v7x's 64 MiB VMEM
        cost_estimate=cost,
    )(x2, w_all, params, p_sum)

    if Np != N:
        out = out[:N]
    # (N, 2, W*2*Cout) -> (B, H, 2, W, 2, Cout) -> (B, 2H, 2W, Cout):
    # pure row-major merges/splits => zero-copy; the pixel shuffle was already
    # performed by the kernel's output layout.
    return out.reshape(B, H, 2, W, 2, Cout).reshape(B, 2 * H, 2 * W, Cout)


def reference_forward(x, weight, bias, gamma, beta, eps=1e-5):
    """Pure-JAX f32 reference matching the PyTorch module."""
    B, H, W, C = x.shape
    Cout = C // 2
    y = jnp.einsum('bhwc,cokl->bhwklo', x.astype(jnp.float32), weight.astype(jnp.float32),
                   precision=jax.lax.Precision.HIGHEST) + bias                 # (B,H,W,2,2,Cout)
    y = jnp.transpose(y, (0, 1, 3, 2, 4, 5)).reshape(B, 2 * H, 2 * W, Cout)
    mu = jnp.mean(y, axis=-1, keepdims=True)
    var = jnp.mean((y - mu) ** 2, axis=-1, keepdims=True)
    return (y - mu) * jax.lax.rsqrt(var + eps) * gamma + beta


if __name__ == "__main__":
    key = jax.random.PRNGKey(0)
    kx, kw, kb, kg, kbt = jax.random.split(key, 5)

    B, H, W, C = 2, 16, 16, 32             # dim=32 -> ConvTranspose2d(32, 16, 2, 2)
    Cout = C // 2
    x = jax.random.normal(kx, (B, H, W, C), jnp.float32)
    weight = 0.2 * jax.random.normal(kw, (C, Cout, 2, 2), jnp.float32)
    bias = 0.1 * jax.random.normal(kb, (Cout,), jnp.float32)
    gamma = 1.0 + 0.1 * jax.random.normal(kg, (Cout,), jnp.float32)
    beta = 0.1 * jax.random.normal(kbt, (Cout,), jnp.float32)

    out = jax.jit(final_patch_expansion)(x, weight, bias, gamma, beta)
    out = jax.block_until_ready(out)
    assert out.shape == (B, 2 * H, 2 * W, Cout)

    ref = reference_forward(x, weight, bias, gamma, beta)
    max_err = float(jnp.max(jnp.abs(out.astype(jnp.float32) - ref)))
    # bf16 MXU inputs with f32 accumulation + f32 LayerNorm math: bf16-level tolerance.
    assert max_err < 5e-2, f"max abs error {max_err}"
    print("KERNEL_OK")
</pallas_src>

<mosaic_0001>
module attributes {stable_mosaic.version = 11 : i64} {
  func.func @_fpe_kernel(%arg0: i32, %arg1: i32, %arg2: memref<32x128xf32, #tpu.memory_space<vmem>>, %arg3: memref<128x512xbf16, #tpu.memory_space<vmem>>, %arg4: memref<2x512xf32, #tpu.memory_space<vmem>>, %arg5: memref<128x128xbf16, #tpu.memory_space<vmem>>, %arg6: memref<32x2x128xf32, #tpu.memory_space<vmem>>) attributes {dimension_semantics = [#tpu.dimension_semantics<parallel>, #tpu.dimension_semantics<parallel>], iteration_bounds = array<i64: 1, 4>, scalar_prefetch = 0 : i64, scratch_operands = 0 : i64, tpu.core_type = #tpu.core_type<tc>, window_params = [{transform_indices = @transform_0, window_bounds = array<i64: 32, 128>}, {pipeline_mode = #tpu.pipeline_mode<synchronous>, transform_indices = @transform_1, window_bounds = array<i64: 128, 512>}, {pipeline_mode = #tpu.pipeline_mode<synchronous>, transform_indices = @transform_2, window_bounds = array<i64: 2, 512>}, {pipeline_mode = #tpu.pipeline_mode<synchronous>, transform_indices = @transform_3, window_bounds = array<i64: 128, 128>}, {transform_indices = @transform_4, window_bounds = array<i64: 32, 2, 128>}]} {
    %c0 = arith.constant 0 : index
    %c0_0 = arith.constant 0 : index
    %0 = vector.load %arg2[%c0, %c0_0] : memref<32x128xf32, #tpu.memory_space<vmem>>, vector<32x128xf32>
    %1 = arith.truncf %0 : vector<32x128xf32> to vector<32x128xbf16>
    %c0_1 = arith.constant 0 : index
    %c0_2 = arith.constant 0 : index
    %2 = vector.load %arg3[%c0_1, %c0_2] : memref<128x512xbf16, #tpu.memory_space<vmem>>, vector<128x512xbf16>
    %cst = arith.constant dense<0.000000e+00> : vector<32x512xf32>
    %3 = tpu.matmul %1, %2, %cst {dimension_numbers = #tpu.dot_dimension_numbers<[1], [0], [0], [1], [0, 0, 1, 1], [], []>} : vector<32x128xbf16>, vector<128x512xbf16>, vector<32x512xf32> -> vector<32x512xf32>
    %c0_3 = arith.constant 0 : index
    %c0_4 = arith.constant 0 : index
    %4 = vector.load %arg4[%c0_3, %c0_4] : memref<2x512xf32, #tpu.memory_space<vmem>>, vector<1x512xf32>
    %5 = vector.broadcast %4 : vector<1x512xf32> to vector<32x512xf32>
    %6 = arith.addf %3, %5 : vector<32x512xf32>
    %c1 = arith.constant 1 : index
    %c0_5 = arith.constant 0 : index
    %7 = vector.load %arg4[%c1, %c0_5] : memref<2x512xf32, #tpu.memory_space<vmem>>, vector<1x128xf32>
    %c1_6 = arith.constant 1 : index
    %c128 = arith.constant 128 : index
    %8 = vector.load %arg4[%c1_6, %c128] : memref<2x512xf32, #tpu.memory_space<vmem>>, vector<1x128xf32>
    %c0_7 = arith.constant 0 : index
    %c0_8 = arith.constant 0 : index
    %9 = vector.load %arg5[%c0_7, %c0_8] : memref<128x128xbf16, #tpu.memory_space<vmem>>, vector<128x128xbf16>
    %10 = vector.extract_strided_slice %6 {offsets = [0, 0], sizes = [32, 128], strides = [1, 1]} : vector<32x512xf32> to vector<32x128xf32>
    %11 = vector.extract_strided_slice %6 {offsets = [0, 256], sizes = [32, 128], strides = [1, 1]} : vector<32x512xf32> to vector<32x128xf32>
    %12 = arith.subf %10, %11 : vector<32x128xf32>
    %13 = arith.mulf %12, %12 : vector<32x128xf32>
    %14 = arith.truncf %13 : vector<32x128xf32> to vector<32x128xbf16>
    %cst_9 = arith.constant dense<0.000000e+00> : vector<32x128xf32>
    %15 = tpu.matmul %14, %9, %cst_9 {dimension_numbers = #tpu.dot_dimension_numbers<[1], [0], [0], [1], [0, 0, 1, 1], [], []>} : vector<32x128xbf16>, vector<128x128xbf16>, vector<32x128xf32> -> vector<32x128xf32>
    %cst_10 = arith.constant 6.250000e-02 : f32
    %16 = vector.broadcast %cst_10 : f32 to vector<32x128xf32>
    %17 = arith.mulf %15, %16 : vector<32x128xf32>
    %cst_11 = arith.constant 9.99999974E-6 : f32
    %18 = vector.broadcast %cst_11 : f32 to vector<32x128xf32>
    %19 = arith.addf %17, %18 : vector<32x128xf32>
    %20 = math.rsqrt %19 : vector<32x128xf32>
    %21 = arith.mulf %12, %20 : vector<32x128xf32>
    %22 = vector.broadcast %7 : vector<1x128xf32> to vector<32x128xf32>
    %23 = arith.mulf %21, %22 : vector<32x128xf32>
    %24 = vector.broadcast %8 : vector<1x128xf32> to vector<32x128xf32>
    %25 = arith.addf %23, %24 : vector<32x128xf32>
    %c0_12 = arith.constant 0 : index
    %c0_13 = arith.constant 0 : index
    %c0_14 = arith.constant 0 : index
    %26 = vector.load %arg6[%c0_12, %c0_13, %c0_14] : memref<32x2x128xf32, #tpu.memory_space<vmem>>, vector<32x1x128xf32>
    %27 = vector.shape_cast %26 : vector<32x1x128xf32> to vector<32x128xf32>
    %28 = vector.shape_cast %25 : vector<32x128xf32> to vector<32x1x128xf32>
    tpu.vector_store %arg6[%c0_12, %c0_13, %c0_14], %28 {strides = array<i32>} : memref<32x2x128xf32, #tpu.memory_space<vmem>>, vector<32x1x128xf32>,
    %29 = vector.extract_strided_slice %6 {offsets = [0, 128], sizes = [32, 128], strides = [1, 1]} : vector<32x512xf32> to vector<32x128xf32>
    %30 = vector.extract_strided_slice %6 {offsets = [0, 384], sizes = [32, 128], strides = [1, 1]} : vector<32x512xf32> to vector<32x128xf32>
    %31 = arith.subf %29, %30 : vector<32x128xf32>
    %32 = arith.mulf %31, %31 : vector<32x128xf32>
    %33 = arith.truncf %32 : vector<32x128xf32> to vector<32x128xbf16>
    %cst_15 = arith.constant dense<0.000000e+00> : vector<32x128xf32>
    %34 = tpu.matmul %33, %9, %cst_15 {dimension_numbers = #tpu.dot_dimension_numbers<[1], [0], [0], [1], [0, 0, 1, 1], [], []>} : vector<32x128xbf16>, vector<128x128xbf16>, vector<32x128xf32> -> vector<32x128xf32>
    %cst_16 = arith.constant 6.250000e-02 : f32
    %35 = vector.broadcast %cst_16 : f32 to vector<32x128xf32>
    %36 = arith.mulf %34, %35 : vector<32x128xf32>
    %cst_17 = arith.constant 9.99999974E-6 : f32
    %37 = vector.broadcast %cst_17 : f32 to vector<32x128xf32>
    %38 = arith.addf %36, %37 : vector<32x128xf32>
    %39 = math.rsqrt %38 : vector<32x128xf32>
    %40 = arith.mulf %31, %39 : vector<32x128xf32>
    %41 = vector.broadcast %7 : vector<1x128xf32> to vector<32x128xf32>
    %42 = arith.mulf %40, %41 : vector<32x128xf32>
    %43 = vector.broadcast %8 : vector<1x128xf32> to vector<32x128xf32>
    %44 = arith.addf %42, %43 : vector<32x128xf32>
    %c0_18 = arith.constant 0 : index
    %c1_19 = arith.constant 1 : index
    %c0_20 = arith.constant 0 : index
    %45 = vector.load %arg6[%c0_18, %c1_19, %c0_20] : memref<32x2x128xf32, #tpu.memory_space<vmem>>, vector<32x1x128xf32>
    %46 = vector.shape_cast %45 : vector<32x1x128xf32> to vector<32x128xf32>
    %47 = vector.shape_cast %44 : vector<32x128xf32> to vector<32x1x128xf32>
    tpu.vector_store %arg6[%c0_18, %c1_19, %c0_20], %47 {strides = array<i32>} : memref<32x2x128xf32, #tpu.memory_space<vmem>>, vector<32x1x128xf32>,
    return
  }
  func.func @transform_0(%arg0: i32, %arg1: i32) -> (i32, i32) {
    %c0_i32 = arith.constant 0 : i32
    return %arg0, %arg1 : i32, i32
  }
  func.func @transform_1(%arg0: i32, %arg1: i32) -> (i32, i32) {
    %c0_i32 = arith.constant 0 : i32
    %c0_i32_0 = arith.constant 0 : i32
    %c0_i32_1 = arith.constant 0 : i32
    return %c0_i32, %c0_i32_0 : i32, i32
  }
  func.func @transform_2(%arg0: i32, %arg1: i32) -> (i32, i32) {
    %c0_i32 = arith.constant 0 : i32
    %c0_i32_0 = arith.constant 0 : i32
    %c0_i32_1 = arith.constant 0 : i32
    return %c0_i32, %c0_i32_0 : i32, i32
  }
  func.func @transform_3(%arg0: i32, %arg1: i32) -> (i32, i32) {
    %c0_i32 = arith.constant 0 : i32
    %c0_i32_0 = arith.constant 0 : i32
    %c0_i32_1 = arith.constant 0 : i32
    return %c0_i32, %c0_i32_0 : i32, i32
  }
  func.func @transform_4(%arg0: i32, %arg1: i32) -> (i32, i32, i32) {
    %c0_i32 = arith.constant 0 : i32
    %c0_i32_0 = arith.constant 0 : i32
    return %arg0, %c0_i32, %arg1 : i32, i32, i32
  }
}

</mosaic_0001>

<llo_original>
// kernel: tile.23
$region0: #{tile.23}
  #allocation0 [shape = 's32[1]{0}', space=sflag, size = 0x4, scoped, tag = 'scoped memory for tile.23']
  %s0 = inlined_call_operand.vmem [shape: f32[16], index: 0, kind: input, shape index: {}]
  %s1 = inlined_call_operand.vmem [shape: f32[8,16], index: 1, kind: output, shape index: {}]
  // Predicated region
  $region2: #{tile.23} parent=0 // pred_check
    _
  $region3: #{tile.23} parent=0 // pred_check_branch
    %3 = sbr.rel (0) target = $region5
  $region4: #{tile.23} parent=0 // pred_region
    _
  $region5: #{tile.23} parent=0 // pred_fallthru
    _
  %v4 = vld [vmem:[%s0] ss:$0 sm:$0xff]
  %5 = vst [vmem:[%s1] sm:$0xff] %v4

// kernel: tile.24
$region0: #{tile.24}
  %s0 = inlined_call_operand.vmem [shape: f32[8,16], index: 0, kind: input, shape index: {}]
  %s1 = inlined_call_operand.vmem [shape: f32[128], index: 1, kind: output, shape index: {}]
  $region1: #{tile.24} parent=0
    #allocation0 [shape = 'u8[4096]{0}', space=vmem, size = 0x1000, scoped, tag = 'scoped mem for output reshape']
    %v2 = vld [vmem:[%s0] sm:$0x1]
    %vm3 = vcmask 130048
    %4 = vst.msk [vmem:[#allocation0] sm:$0x1] %vm3, %v2
    %s5 = scalar_lea.vmem %s0, 7
    %v6 = vld [vmem:[%s5] sm:$0x1]
    %7 = vrot.lane.b32.xlu0 %v6, 112
    %v8 = vpop.permute.xlu0 %7
    %vm9 = vcmask 1048448
    %10 = vst.msk [vmem:[#allocation0] sm:$0x1] %vm9, %v8
    %s11 = scalar_lea.vmem %s0, 6
    %v12 = vld [vmem:[%s11] sm:$0x1]
    %13 = vrot.lane.b32.xlu0 %v12, 96
    %v14 = vpop.permute.xlu0 %13
    %vm15 = vcmask 917248
    %16 = vst.msk [vmem:[#allocation0] sm:$0x1] %vm15, %v14
    %s17 = scalar_lea.vmem %s0, 5
    %v18 = vld [vmem:[%s17] sm:$0x1]
    %19 = vrot.lane.b32.xlu0 %v18, 80
    %v20 = vpop.permute.xlu0 %19
    %vm21 = vcmask 786048
    %22 = vst.msk [vmem:[#allocation0] sm:$0x1] %vm21, %v20
    %s23 = scalar_lea.vmem %s0, 4
    %v24 = vld [vmem:[%s23] sm:$0x1]
    %25 = vrot.lane.b32.xlu0 %v24, 64
    %v26 = vpop.permute.xlu0 %25
    %vm27 = vcmask 654848
    %28 = vst.msk [vmem:[#allocation0] sm:$0x1] %vm27, %v26
    %s29 = scalar_lea.vmem %s0, 3
    %v30 = vld [vmem:[%s29] sm:$0x1]
    %31 = vrot.lane.b32.xlu0 %v30, 48
    %v32 = vpop.permute.xlu0 %31
    %vm33 = vcmask 523648
    %34 = vst.msk [vmem:[#allocation0] sm:$0x1] %vm33, %v32
    %s35 = scalar_lea.vmem %s0, 2
    %v36 = vld [vmem:[%s35] sm:$0x1]
    %37 = vrot.lane.b32.xlu0 %v36, 32
    %v38 = vpop.permute.xlu0 %37
    %vm39 = vcmask 392448
    %40 = vst.msk [vmem:[#allocation0] sm:$0x1] %vm39, %v38
    %s41 = scalar_lea.vmem %s0, 1
    %v42 = vld [vmem:[%s41] sm:$0x1]
    %43 = vrot.lane.b32.xlu0 %v42, 16
    %v44 = vpop.permute.xlu0 %43
    %vm45 = vcmask 261248
    %46 = vst.msk [vmem:[#allocation0] sm:$0x1] %vm45, %v44
    %s48 = sshllo.u32 0, 1
    %v50 = vld [vmem:[#allocation0] sm:%s48]
    %s51 = sshllo.u32 0, 1
    %52 = vst [vmem:[%s1] sm:%s51] %v50

// kernel: tile.18
$region0: #{tile.18}
  #allocation0 [shape = 's32[1]{0}', space=sflag, size = 0x4, scoped, tag = 'scoped memory for tile.18']
  %s0 = inlined_call_operand.vmem [shape: f32[16], index: 0, kind: input, shape index: {}]
  %s1 = inlined_call_operand.vmem [shape: f32[16,16], index: 1, kind: output, shape index: {}]
  // Predicated region
  $region2: #{tile.18} parent=0 // pred_check
    _
  $region3: #{tile.18} parent=0 // pred_check_branch
    %3 = sbr.rel (0) target = $region5
  $region4: #{tile.18} parent=0 // pred_region
    _
  $region5: #{tile.18} parent=0 // pred_fallthru
    _
  %v4 = vld [vmem:[%s0] ss:$0 sm:$0xff]
  %5 = vst [vmem:[%s1] sm:$0xff] %v4
  %s6 = scalar_lea.vmem %s1, 8
  %7 = vst [vmem:[%s6] sm:$0xff] %v4

// kernel: tile.19
$region0: #{tile.19}
  %s0 = inlined_call_operand.vmem [shape: f32[16,16], index: 0, kind: input, shape index: {}]
  %s1 = inlined_call_operand.vmem [shape: f32[256], index: 1, kind: output, shape index: {}]
  $region1: #{tile.19} parent=0
    #allocation0 [shape = 'u8[4096]{0}', space=vmem, size = 0x1000, scoped, tag = 'scoped mem for output reshape']
    %s2 = smov 3
    %v3 = vld [vmem:[%s0] ss:$8 sm:%s2]
    %vm4 = vcmask 130048
    %5 = vst.msk [vmem:[#allocation0] sm:$0x3] %vm4, %v3
    %s6 = scalar_lea.vmem %s0, 7
    %s7 = smov 3
    %v8 = vld [vmem:[%s6] ss:$8 sm:%s7]
    %9 = vrot.lane.b32.xlu0 %v8, 112
    %v10 = vpop.permute.xlu0 %9
    %vm11 = vcmask 1048448
    %12 = vst.msk [vmem:[#allocation0] sm:$0x3] %vm11, %v10
    %s13 = scalar_lea.vmem %s0, 6
    %s14 = smov 3
    %v15 = vld [vmem:[%s13] ss:$8 sm:%s14]
    %16 = vrot.lane.b32.xlu0 %v15, 96
    %v17 = vpop.permute.xlu0 %16
    %vm18 = vcmask 917248
    %19 = vst.msk [vmem:[#allocation0] sm:$0x3] %vm18, %v17
    %s20 = scalar_lea.vmem %s0, 5
    %s21 = smov 3
    %v22 = vld [vmem:[%s20] ss:$8 sm:%s21]
    %23 = vrot.lane.b32.xlu0 %v22, 80
    %v24 = vpop.permute.xlu0 %23
    %vm25 = vcmask 786048
    %26 = vst.msk [vmem:[#allocation0] sm:$0x3] %vm25, %v24
    %s27 = scalar_lea.vmem %s0, 4
    %s28 = smov 3
    %v29 = vld [vmem:[%s27] ss:$8 sm:%s28]
    %30 = vrot.lane.b32.xlu0 %v29, 64
    %v31 = vpop.permute.xlu0 %30
    %vm32 = vcmask 654848
    %33 = vst.msk [vmem:[#allocation0] sm:$0x3] %vm32, %v31
    %s34 = scalar_lea.vmem %s0, 3
    %s35 = smov 3
    %v36 = vld [vmem:[%s34] ss:$8 sm:%s35]
    %37 = vrot.lane.b32.xlu0 %v36, 48
    %v38 = vpop.permute.xlu0 %37
    %vm39 = vcmask 523648
    %40 = vst.msk [vmem:[#allocation0] sm:$0x3] %vm39, %v38
    %s41 = scalar_lea.vmem %s0, 2
    %s42 = smov 3
    %v43 = vld [vmem:[%s41] ss:$8 sm:%s42]
    %44 = vrot.lane.b32.xlu0 %v43, 32
    %v45 = vpop.permute.xlu0 %44
    %vm46 = vcmask 392448
    %47 = vst.msk [vmem:[#allocation0] sm:$0x3] %vm46, %v45
    %s48 = scalar_lea.vmem %s0, 1
    %s49 = smov 3
    %v50 = vld [vmem:[%s48] ss:$8 sm:%s49]
    %51 = vrot.lane.b32.xlu0 %v50, 16
    %v52 = vpop.permute.xlu0 %51
    %vm53 = vcmask 261248
    %54 = vst.msk [vmem:[#allocation0] sm:$0x3] %vm53, %v52
    %s56 = sshllo.u32 0, 2
    %v58 = vld [vmem:[#allocation0] sm:%s56]
    %s59 = sshllo.u32 0, 2
    %60 = vst [vmem:[%s1] sm:%s59] %v58

// kernel: final_patch_expansion.1
$region0: #{final_patch_expansion.1}
  #allocation0 [shape = 'u32[]', space=smem, size = 0x4, offset = 0x4, fixed_abs, tag = 'smem constant byte address 0x4 - core index']
  #allocation1 [shape = 'u32[144,128]{1,0:T(1,128)}', space=vmem, size = 0x12000, scoped, tag = 'internal scratch']
  %s0 = inlined_call_operand.vmem [shape: f32[32,512], index: 0, kind: input, shape index: {}]
  %s1 = inlined_call_operand.vmem [shape: bf16[128,512], index: 1, kind: input, shape index: {}]
  %s2 = inlined_call_operand.vmem [shape: f32[2,512], index: 2, kind: input, shape index: {}]
  %s3 = inlined_call_operand.vmem [shape: bf16[128,128], index: 3, kind: input, shape index: {}]
  %s4 = inlined_call_operand.vmem [shape: f32[32,2,512], index: 4, kind: output, shape index: {}]
  %s5 = sld [smem:[#allocation0]]
  $region124: #{final_patch_expansion.1} parent=0
    _
  %s7 = ssub.s32 1, %s5
  %s8 = scalar_select 0, %s7, %s5
  $region1: #{final_patch_expansion.1} parent=0
    #allocation2 [shape = 'u8[32768]{0}', space=vmem, size = 0x8000, scoped, tag = 'input window, operand 0']
    #allocation3 [shape = 'u8[65536]{0}', space=vmem, size = 0x10000, scoped, tag = 'output window, operand 0']
    loop: start=0, step=1, limit=6
    $region2: #{final_patch_expansion.1} parent=1 // loop_pre_header
      _
    $region3: #{final_patch_expansion.1} parent=1 // loop_header
      %s10 = sphi 0, %s14
      %p11 = scmp.ge.s32.totalorder %s10, 6
      %s17 = sphi 0, %s29
      %s18 = sphi 0, %s25
      %s19 = sphi 0, %s17
      %s20 = sphi 0, %s18
      %s21 = sphi 0, %s19
      %s22 = sphi 0, %s20
      %s34 = sphi 0, %s36
      %s37 = sphi 0, %s34
      %s38 = sphi 0, %s37
      %s54 = sphi 0, %s38
      %s58 = sphi 0, %s58
      %s60 = sphi 0, %s58
      %s61 = sphi 0, %s60
      %s75 = sphi 0, %s61
      %s79 = sphi 0, %s79
      %s81 = sphi 0, %s79
      %s82 = sphi 0, %s81
      %s96 = sphi 0, %s82
      %s100 = sphi 0, %s100
      %s102 = sphi 0, %s100
      %s103 = sphi 0, %s102
      %s117 = sphi 0, %s103
      %s125 = sphi 0, %s127
      %s128 = sphi 0, %s125
      %s129 = sphi 0, %s128
      %s145 = sphi 0, %s129
    $region4: #{final_patch_expansion.1} parent=1 // loop_header_branch
      %13 = sbr.rel (%p11) target = $region8
    $region5: #{final_patch_expansion.1} parent=1 // loop_body
      %s15 = ssub.s32 %s10, 1
      %s16 = ssub.s32 %s10, 2
      %s23 = sadd.s32 1, %s18
      %p24 = scmp.ge.s32.totalorder %s23, 4
      %s25 = scalar_select %p24, 0, %s23
      %s26 = sadd.s32 1, %s17
      %s27 = scalar_select %p24, %s26, %s17
      %p28 = scmp.ge.s32.totalorder %s27, 1
      %s29 = scalar_select %p28, 0, %s27
      %s30 = ssub.s32 %s17, %s29
      %s31 = ssub.s32 %s18, %s25
      %s32 = sor.u32 %s30, %s31
      %p33 = scmp.eq.s32.totalorder %s32, 0
      %s35 = sadd.s32 %s34, 1
      %s36 = scalar_select %p33, %s34, %s35
      %p39 = pneg %p33
      %p40 = scmp.eq.s32.totalorder %s10, 3
      %p41 = por %p39, %p40
      %p42 = scmp.ne.s32.totalorder %s34, %s37
      %p43 = scmp.eq.s32.totalorder %s10, 0
      %p44 = por %p42, %p43
      %p45 = scmp.ne.s32.totalorder %s34, %s37
      %p46 = scmp.eq.s32.totalorder %s15, 3
      %p47 = por %p45, %p46
      %p48 = scmp.ne.s32.totalorder %s37, %s38
      %p49 = scmp.eq.s32.totalorder %s15, 0
      %p50 = por %p48, %p49
      %p51 = scmp.ne.s32.totalorder %s37, %s38
      %p52 = scmp.eq.s32.totalorder %s16, 3
      %p53 = por %p51, %p52
      %p55 = scmp.ne.s32.totalorder %s38, %s54
      %p56 = scmp.eq.s32.totalorder %s16, 0
      %p57 = por %p55, %p56
      %s59 = sadd.s32 %s58, 1
      %p62 = scmp.eq.s32.totalorder %s10, 3
      %p63 = scmp.ne.s32.totalorder %s58, %s60
      %p64 = scmp.eq.s32.totalorder %s10, 0
      %p65 = por %p63, %p64
      %p66 = scmp.ne.s32.totalorder %s58, %s60
      %p67 = scmp.eq.s32.totalorder %s15, 3
      %p68 = por %p66, %p67
      %p69 = scmp.ne.s32.totalorder %s60, %s61
      %p70 = scmp.eq.s32.totalorder %s15, 0
      %p71 = por %p69, %p70
      %p72 = scmp.ne.s32.totalorder %s60, %s61
      %p73 = scmp.eq.s32.totalorder %s16, 3
      %p74 = por %p72, %p73
      %p76 = scmp.ne.s32.totalorder %s61, %s75
      %p77 = scmp.eq.s32.totalorder %s16, 0
      %p78 = por %p76, %p77
      %s80 = sadd.s32 %s79, 1
      %p83 = scmp.eq.s32.totalorder %s10, 3
      %p84 = scmp.ne.s32.totalorder %s79, %s81
      %p85 = scmp.eq.s32.totalorder %s10, 0
      %p86 = por %p84, %p85
      %p87 = scmp.ne.s32.totalorder %s79, %s81
      %p88 = scmp.eq.s32.totalorder %s15, 3
      %p89 = por %p87, %p88
      %p90 = scmp.ne.s32.totalorder %s81, %s82
      %p91 = scmp.eq.s32.totalorder %s15, 0
      %p92 = por %p90, %p91
      %p93 = scmp.ne.s32.totalorder %s81, %s82
      %p94 = scmp.eq.s32.totalorder %s16, 3
      %p95 = por %p93, %p94
      %p97 = scmp.ne.s32.totalorder %s82, %s96
      %p98 = scmp.eq.s32.totalorder %s16, 0
      %p99 = por %p97, %p98
      %s101 = sadd.s32 %s100, 1
      %p104 = scmp.eq.s32.totalorder %s10, 3
      %p105 = scmp.ne.s32.totalorder %s100, %s102
      %p106 = scmp.eq.s32.totalorder %s10, 0
      %p107 = por %p105, %p106
      %p108 = scmp.ne.s32.totalorder %s100, %s102
      %p109 = scmp.eq.s32.totalorder %s15, 3
      %p110 = por %p108, %p109
      %p111 = scmp.ne.s32.totalorder %s102, %s103
      %p112 = scmp.eq.s32.totalorder %s15, 0
      %p113 = por %p111, %p112
      %p114 = scmp.ne.s32.totalorder %s102, %s103
      %p115 = scmp.eq.s32.totalorder %s16, 3
      %p116 = por %p114, %p115
      %p118 = scmp.ne.s32.totalorder %s103, %s117
      %p119 = scmp.eq.s32.totalorder %s16, 0
      %p120 = por %p118, %p119
      %s121 = ssub.s32 %s17, %s29
      %s122 = ssub.s32 %s18, %s25
      %s123 = sor.u32 %s121, %s122
      %p124 = scmp.eq.s32.totalorder %s123, 0
      %s126 = sadd.s32 %s125, 1
      %s127 = scalar_select %p124, %s125, %s126
      %p130 = pneg %p124
      %p131 = scmp.eq.s32.totalorder %s10, 3
      %p132 = por %p130, %p131
      %p133 = scmp.ne.s32.totalorder %s125, %s128
      %p134 = scmp.eq.s32.totalorder %s10, 0
      %p135 = por %p133, %p134
      %p136 = scmp.ne.s32.totalorder %s125, %s128
      %p137 = scmp.eq.s32.totalorder %s15, 3
      %p138 = por %p136, %p137
      %p139 = scmp.ne.s32.totalorder %s128, %s129
      %p140 = scmp.eq.s32.totalorder %s15, 0
      %p141 = por %p139, %p140
      %p142 = scmp.ne.s32.totalorder %s128, %s129
      %p143 = scmp.eq.s32.totalorder %s16, 3
      %p144 = por %p142, %p143
      %p146 = scmp.ne.s32.totalorder %s129, %s145
      %p147 = scmp.eq.s32.totalorder %s16, 0
      %p148 = por %p146, %p147
      %p149 = scmp.le.s32.totalorder 1, %s10
      %p150 = scmp.lt.s32.totalorder %s10, 5
      %p151 = pnand %p149, %p150
      %p152 = pneg %p151
      // Predicated region
      $region9: #{final_patch_expansion.1} parent=5 // pred_check
        _
      $region10: #{final_patch_expansion.1} parent=5 // pred_check_branch
        %154 = sbr.rel (%p151) target = $region12
      $region11: #{final_patch_expansion.1} parent=5 // pred_region
        %s155 = ssub.s32 %s10, 1
        // Predicated region
        $region13: #{final_patch_expansion.1} parent=11 // pred_check
          %p156 = pneg %p71
        $region14: #{final_patch_expansion.1} parent=11 // pred_check_branch
          %158 = sbr.rel (%p156) target = $region16
        $region15: #{final_patch_expansion.1} parent=11 // pred_region
          _
        $region16: #{final_patch_expansion.1} parent=11 // pred_fallthru
          _
        // Predicated region
        $region17: #{final_patch_expansion.1} parent=11 // pred_check
          %p159 = pneg %p92
        $region18: #{final_patch_expansion.1} parent=11 // pred_check_branch
          %161 = sbr.rel (%p159) target = $region20
        $region19: #{final_patch_expansion.1} parent=11 // pred_region
          _
        $region20: #{final_patch_expansion.1} parent=11 // pred_fallthru
          _
        // Predicated region
        $region21: #{final_patch_expansion.1} parent=11 // pred_check
          %p162 = pneg %p113
        $region22: #{final_patch_expansion.1} parent=11 // pred_check_branch
          %164 = sbr.rel (%p162) target = $region24
        $region23: #{final_patch_expansion.1} parent=11 // pred_region
          _
        $region24: #{final_patch_expansion.1} parent=11 // pred_fallthru
          _
      $region12: #{final_patch_expansion.1} parent=5 // pred_fallthru
        _
      %p165 = scmp.lt.s32.totalorder %s10, 4
      // Predicated region
      $region25: #{final_patch_expansion.1} parent=5 // pred_check
        %p166 = pneg %p165
      $region26: #{final_patch_expansion.1} parent=5 // pred_check_branch
        %168 = sbr.rel (%p166) target = $region28
      $region27: #{final_patch_expansion.1} parent=5 // pred_region
        // Predicated region
        $region29: #{final_patch_expansion.1} parent=27 // pred_check
          %p169 = pneg %p44
        $region30: #{final_patch_expansion.1} parent=27 // pred_check_branch
          %171 = sbr.rel (%p169) target = $region32
        $region31: #{final_patch_expansion.1} parent=27 // pred_region
          %s172 = sand.u32 %s34, 1
          %s173 = sand.u32 %s34, 1
          %s174 = smul.addr %s173, 32
          %s175 = scalar_lea.vmem [#allocation2], %s174
          %s176 = smul.u32 4, %s17
          %s177 = smul.addr %s176, 4
          %s178 = sadd.s32 %s18, %s177
          %s179 = smul.addr %s178, 8
          %s180 = scalar_lea.vmem %s0, %s179
          // Predicated region
          $region33: #{final_patch_expansion.1} parent=31 // pred_check
            _
          $region34: #{final_patch_expansion.1} parent=31 // pred_check_branch
            %182 = sbr.rel (0) target = $region36
          $region35: #{final_patch_expansion.1} parent=31 // pred_region
            // Predicated region
            $region37: #{final_patch_expansion.1} parent=35 // pred_check
              _
            $region38: #{final_patch_expansion.1} parent=35 // pred_check_branch
              %184 = sbr.rel (0) target = $region40
            $region39: #{final_patch_expansion.1} parent=35 // pred_region
              // Predicated region
              $region52: #{final_patch_expansion.1} parent=39 // pred_check
                _
              $region53: #{final_patch_expansion.1} parent=39 // pred_check_branch
                %205 = sbr.rel (0) target = $region55
              $region54: #{final_patch_expansion.1} parent=39 // pred_region
                loop: start=0, step=1, limit=1
                $region56: #{final_patch_expansion.1} parent=54 // loop_pre_header
                  _
                $region57: #{final_patch_expansion.1} parent=54 // loop_header
                  %s207 = sphi 0, %s211
                  %p208 = scmp.ge.s32.totalorder %s207, 1
                  %s212 = sphi %s180, %s180
                  %s213 = sphi %s175, %s175
                $region58: #{final_patch_expansion.1} parent=54 // loop_header_branch
                  %210 = sbr.rel (%p208) target = $region62
                $region59: #{final_patch_expansion.1} parent=54 // loop_body
                  %v214 = vld [vmem:[%s212] sm:$0xff]
                  %215 = vst [vmem:[%s213] sm:$0xff] %v214
                  %v216 = vld [vmem:[%s212 + $0x20] sm:$0xff]
                  %217 = vst [vmem:[%s213 + $0x8] sm:$0xff] %v216
                  %v218 = vld [vmem:[%s212 + $0x40] sm:$0xff]
                  %219 = vst [vmem:[%s213 + $0x10] sm:$0xff] %v218
                  %v220 = vld [vmem:[%s212 + $0x60] sm:$0xff]
                  %221 = vst [vmem:[%s213 + $0x18] sm:$0xff] %v220
                $region60: #{final_patch_expansion.1} parent=54 // loop_footer
                  %s211 = sadd.s32 1, %s207
                $region61: #{final_patch_expansion.1} parent=54 // loop_footer_branch
                  %206 = sbr.rel target = $region57
                $region62: #{final_patch_expansion.1} parent=54 // loop_exit
                  _
              $region55: #{final_patch_expansion.1} parent=39 // pred_fallthru
                _
              // Predicated region
              $region63: #{final_patch_expansion.1} parent=39 // pred_check
                _
              $region64: #{final_patch_expansion.1} parent=39 // pred_check_branch
                %223 = sbr.rel target = $region66
              $region65: #{final_patch_expansion.1} parent=39 // pred_region
                _
              $region66: #{final_patch_expansion.1} parent=39 // pred_fallthru
                _
            $region40: #{final_patch_expansion.1} parent=35 // pred_fallthru
              _
            // Predicated region
            $region41: #{final_patch_expansion.1} parent=35 // pred_check
              _
            $region42: #{final_patch_expansion.1} parent=35 // pred_check_branch
              %186 = sbr.rel target = $region44
            $region43: #{final_patch_expansion.1} parent=35 // pred_region
              loop: start=0, step=1, limit=1
              $region45: #{final_patch_expansion.1} parent=43 // loop_pre_header
                _
              $region46: #{final_patch_expansion.1} parent=43 // loop_header
                %s189 = sphi 0, %s193
                %p190 = scmp.ge.s32.totalorder %s189, 1
                %s194 = sphi %s180, %s180
                %s195 = sphi %s175, %s175
              $region47: #{final_patch_expansion.1} parent=43 // loop_header_branch
                %192 = sbr.rel (%p190) target = $region51
              $region48: #{final_patch_expansion.1} parent=43 // loop_body
                %v196 = vld [vmem:[%s194] sm:$0xff]
                %197 = vst [vmem:[%s195] sm:$0xff] %v196
                %v198 = vld [vmem:[%s194 + $0x20] sm:$0xff]
                %199 = vst [vmem:[%s195 + $0x8] sm:$0xff] %v198
                %v200 = vld [vmem:[%s194 + $0x40] sm:$0xff]
                %201 = vst [vmem:[%s195 + $0x10] sm:$0xff] %v200
                %v202 = vld [vmem:[%s194 + $0x60] sm:$0xff]
                %203 = vst [vmem:[%s195 + $0x18] sm:$0xff] %v202
              $region49: #{final_patch_expansion.1} parent=43 // loop_footer
                %s193 = sadd.s32 1, %s189
              $region50: #{final_patch_expansion.1} parent=43 // loop_footer_branch
                %188 = sbr.rel target = $region46
              $region51: #{final_patch_expansion.1} parent=43 // loop_exit
                _
            $region44: #{final_patch_expansion.1} parent=35 // pred_fallthru
              _
          $region36: #{final_patch_expansion.1} parent=31 // pred_fallthru
            _
          %224 = vnop
        $region32: #{final_patch_expansion.1} parent=27 // pred_fallthru
          _
      $region28: #{final_patch_expansion.1} parent=5 // pred_fallthru
        _
      %p225 = scmp.le.s32.totalorder 1, %s10
      %p226 = scmp.lt.s32.totalorder %s10, 5
      %p227 = pnand %p225, %p226
      %p228 = pneg %p227
      // Predicated region
      $region67: #{final_patch_expansion.1} parent=5 // pred_check
        _
      $region68: #{final_patch_expansion.1} parent=5 // pred_check_branch
        %230 = sbr.rel (%p227) target = $region70
      $region69: #{final_patch_expansion.1} parent=5 // pred_region
        %s231 = ssub.s32 %s10, 1
        %s232 = sand.u32 %s37, 1
        %s233 = sand.u32 %s37, 1
        %s234 = smul.addr %s233, 32
        %s235 = scalar_lea.vmem [#allocation2], %s234
        // Predicated region
        $region71: #{final_patch_expansion.1} parent=69 // pred_check
          %p236 = pneg %p50
        $region72: #{final_patch_expansion.1} parent=69 // pred_check_branch
          %238 = sbr.rel (%p236) target = $region74
        $region73: #{final_patch_expansion.1} parent=69 // pred_region
          _
        $region74: #{final_patch_expansion.1} parent=69 // pred_fallthru
          _
        %s239 = sand.u32 %s37, 1
        %s240 = sand.u32 %s37, 1
        %s241 = smul.addr %s240, 32
        %s242 = scalar_lea.vmem [#allocation2], %s241
        %p243 = pneg %p50
        %p244 = pneg %p47
        %p245 = pneg %p71
        %p246 = pneg %p68
        %p247 = pneg %p92
        %p248 = pneg %p89
        %p249 = pneg %p113
        %p250 = pneg %p110
        %p251 = pneg %p141
        %p252 = pneg %p138
        %s253 = sand.u32 %s128, 1
        %s254 = sand.u32 %s128, 1
        %s255 = smul.addr %s254, 64
        %s256 = scalar_lea.vmem [#allocation3], %s255
        %s257 = smul.u32 4, %s19
        %s258 = smul.u32 32, %s19
        %v260 = vld [vmem:[%s235] sm:$0xff]
        %v261 = vld [vmem:[%s235 + $0x8] sm:$0xff]
        %v262 = vld [vmem:[%s235 + $0x10] sm:$0xff]
        %v263 = vld [vmem:[%s235 + $0x18] sm:$0xff]
        %v264 = vpack.c.bf16 %v261, %v260
        %v265 = vpack.c.bf16 %v263, %v262
        %v266 = vld [vmem:[%s1] sm:$0xff]
        %v267 = vld [vmem:[%s1 + $0x8] sm:$0xff]
        %v268 = vld [vmem:[%s1 + $0x10] sm:$0xff]
        %v269 = vld [vmem:[%s1 + $0x18] sm:$0xff]
        %v270 = vld [vmem:[%s1 + $0x20] sm:$0xff]
        %v271 = vld [vmem:[%s1 + $0x28] sm:$0xff]
        %v272 = vld [vmem:[%s1 + $0x30] sm:$0xff]
        %v273 = vld [vmem:[%s1 + $0x38] sm:$0xff]
        %v274 = vld [vmem:[%s1 + $0x40] sm:$0xff]
        %v275 = vld [vmem:[%s1 + $0x48] sm:$0xff]
        %v276 = vld [vmem:[%s1 + $0x50] sm:$0xff]
        %v277 = vld [vmem:[%s1 + $0x58] sm:$0xff]
        %v278 = vld [vmem:[%s1 + $0x60] sm:$0xff]
        %v279 = vld [vmem:[%s1 + $0x68] sm:$0xff]
        %v280 = vld [vmem:[%s1 + $0x70] sm:$0xff]
        %v281 = vld [vmem:[%s1 + $0x78] sm:$0xff]
        %v282 = vld [vmem:[%s1 + $0x80] sm:$0xff]
        %v283 = vld [vmem:[%s1 + $0x88] sm:$0xff]
        %v284 = vld [vmem:[%s1 + $0x90] sm:$0xff]
        %v285 = vld [vmem:[%s1 + $0x98] sm:$0xff]
        %v286 = vld [vmem:[%s1 + $0xa0] sm:$0xff]
        %v287 = vld [vmem:[%s1 + $0xa8] sm:$0xff]
        %v288 = vld [vmem:[%s1 + $0xb0] sm:$0xff]
        %v289 = vld [vmem:[%s1 + $0xb8] sm:$0xff]
        %v290 = vld [vmem:[%s1 + $0xc0] sm:$0xff]
        %v291 = vld [vmem:[%s1 + $0xc8] sm:$0xff]
        %v292 = vld [vmem:[%s1 + $0xd0] sm:$0xff]
        %v293 = vld [vmem:[%s1 + $0xd8] sm:$0xff]
        %v294 = vld [vmem:[%s1 + $0xe0] sm:$0xff]
        %v295 = vld [vmem:[%s1 + $0xe8] sm:$0xff]
        %v296 = vld [vmem:[%s1 + $0xf0] sm:$0xff]
        %v297 = vld [vmem:[%s1 + $0xf8] sm:$0xff]
        %v298 = vld [vmem:[%s2] ss:$2 sm:$0xf]
        %v300 = vlaneseq
        %v301 = vshrl.u32 %v300, 7
        %v302 = vsub.s32 0, %v301
        %v303 = vrot.slane %v298, %v302
        %v304 = vlaneseq
        %v305 = vshrl.u32 %v304, 7
        %v306 = vsub.s32 1, %v305
        %v307 = vrot.slane %v298, %v306
        %v308 = vlaneseq
        %v309 = vshrl.u32 %v308, 7
        %v310 = vsub.s32 2, %v309
        %v311 = vrot.slane %v298, %v310
        %v312 = vlaneseq
        %v313 = vshrl.u32 %v312, 7
        %v314 = vsub.s32 3, %v313
        %v315 = vrot.slane %v298, %v314
        %v352 = vunpack.c.l.b16 %v266
        %v353 = vunpack.c.h.b16 %v266
        %v354 = vunpack.c.l.b16 %v267
        %v355 = vunpack.c.h.b16 %v267
        %v356 = vunpack.c.l.b16 %v268
        %v357 = vunpack.c.h.b16 %v268
        %v358 = vunpack.c.l.b16 %v269
        %v359 = vunpack.c.h.b16 %v269
        %v360 = vunpack.c.l.b16 %v270
        %v361 = vunpack.c.h.b16 %v270
        %v362 = vunpack.c.l.b16 %v271
        %v363 = vunpack.c.h.b16 %v271
        %v364 = vunpack.c.l.b16 %v272
        %v365 = vunpack.c.h.b16 %v272
        %v366 = vunpack.c.l.b16 %v273
        %v367 = vunpack.c.h.b16 %v273
        %v368 = vunpack.c.l.b16 %v274
        %v369 = vunpack.c.h.b16 %v274
        %v370 = vunpack.c.l.b16 %v275
        %v371 = vunpack.c.h.b16 %v275
        %v372 = vunpack.c.l.b16 %v276
        %v373 = vunpack.c.h.b16 %v276
        %v374 = vunpack.c.l.b16 %v277
        %v375 = vunpack.c.h.b16 %v277
        %v376 = vunpack.c.l.b16 %v278
        %v377 = vunpack.c.h.b16 %v278
        %v378 = vunpack.c.l.b16 %v279
        %v379 = vunpack.c.h.b16 %v279
        %v380 = vunpack.c.l.b16 %v280
        %v381 = vunpack.c.h.b16 %v280
        %v382 = vunpack.c.l.b16 %v281
        %v383 = vunpack.c.h.b16 %v281
        %v384 = vunpack.c.l.b16 %v282
        %v385 = vunpack.c.h.b16 %v282
        %v386 = vunpack.c.l.b16 %v283
        %v387 = vunpack.c.h.b16 %v283
        %v388 = vunpack.c.l.b16 %v284
        %v389 = vunpack.c.h.b16 %v284
        %v390 = vunpack.c.l.b16 %v285
        %v391 = vunpack.c.h.b16 %v285
        %v392 = vunpack.c.l.b16 %v286
        %v393 = vunpack.c.h.b16 %v286
        %v394 = vunpack.c.l.b16 %v287
        %v395 = vunpack.c.h.b16 %v287
        %v396 = vunpack.c.l.b16 %v288
        %v397 = vunpack.c.h.b16 %v288
        %v398 = vunpack.c.l.b16 %v289
        %v399 = vunpack.c.h.b16 %v289
        %v400 = vunpack.c.l.b16 %v290
        %v401 = vunpack.c.h.b16 %v290
        %v402 = vunpack.c.l.b16 %v291
        %v403 = vunpack.c.h.b16 %v291
        %v404 = vunpack.c.l.b16 %v292
        %v405 = vunpack.c.h.b16 %v292
        %v406 = vunpack.c.l.b16 %v293
        %v407 = vunpack.c.h.b16 %v293
        %v408 = vunpack.c.l.b16 %v294
        %v409 = vunpack.c.h.b16 %v294
        %v410 = vunpack.c.l.b16 %v295
        %v411 = vunpack.c.h.b16 %v295
        %v412 = vunpack.c.l.b16 %v296
        %v413 = vunpack.c.h.b16 %v296
        %v414 = vunpack.c.l.b16 %v297
        %v415 = vunpack.c.h.b16 %v297
        %v416 = vpack.c.b16 %v356, %v352
        %v417 = vpack.c.b16 %v357, %v353
        %v418 = vpack.c.b16 %v358, %v354
        %v419 = vpack.c.b16 %v359, %v355
        %v420 = vpack.c.b16 %v364, %v360
        %v421 = vpack.c.b16 %v365, %v361
        %v422 = vpack.c.b16 %v366, %v362
        %v423 = vpack.c.b16 %v367, %v363
        %v424 = vpack.c.b16 %v372, %v368
        %v425 = vpack.c.b16 %v373, %v369
        %v426 = vpack.c.b16 %v374, %v370
        %v427 = vpack.c.b16 %v375, %v371
        %v428 = vpack.c.b16 %v380, %v376
        %v429 = vpack.c.b16 %v381, %v377
        %v430 = vpack.c.b16 %v382, %v378
        %v431 = vpack.c.b16 %v383, %v379
        %v432 = vpack.c.b16 %v388, %v384
        %v433 = vpack.c.b16 %v389, %v385
        %v434 = vpack.c.b16 %v390, %v386
        %v435 = vpack.c.b16 %v391, %v387
        %v436 = vpack.c.b16 %v396, %v392
        %v437 = vpack.c.b16 %v397, %v393
        %v438 = vpack.c.b16 %v398, %v394
        %v439 = vpack.c.b16 %v399, %v395
        %v440 = vpack.c.b16 %v404, %v400
        %v441 = vpack.c.b16 %v405, %v401
        %v442 = vpack.c.b16 %v406, %v402
        %v443 = vpack.c.b16 %v407, %v403
        %v444 = vpack.c.b16 %v412, %v408
        %v445 = vpack.c.b16 %v413, %v409
        %v446 = vpack.c.b16 %v414, %v410
        %v447 = vpack.c.b16 %v415, %v411
        %480 = vmatprep.subr.bf16.mxu0 %v417
        %481 = vmatpush1.bf16.msra.mxu0 %v416
        %482 = vmatprep.subr.bf16.mxu0 %v421
        %483 = vmatpush1.bf16.msra.mxu0 %v420
        %484 = vmatprep.subr.bf16.mxu0 %v425
        %485 = vmatpush1.bf16.msra.mxu0 %v424
        %486 = vmatprep.subr.bf16.mxu0 %v429
        %487 = vmatpush1.bf16.msra.mxu0 %v428
        %488 = vmatprep.subr.bf16.mxu0 %v433
        %489 = vmatpush1.bf16.msra.mxu0 %v432
        %490 = vmatprep.subr.bf16.mxu0 %v437
        %491 = vmatpush1.bf16.msra.mxu0 %v436
        %492 = vmatprep.subr.bf16.mxu0 %v441
        %493 = vmatpush1.bf16.msra.mxu0 %v440
        %494 = vmatprep.subr.bf16.mxu0 %v445
        %495 = vmatpush1.bf16.msra.mxu0 %v444
        %496 = vmatprep.subr.bf16.mxu0 0
        %497 = vmatpush1.bf16.msra.mxu0 0
        %498 = vmatprep.subr.bf16.mxu0 0
        %499 = vmatpush1.bf16.msra.mxu0 0
        %500 = vmatprep.subr.bf16.mxu0 0
        %501 = vmatpush1.bf16.msra.mxu0 0
        %502 = vmatprep.subr.bf16.mxu0 0
        %503 = vmatpush1.bf16.msra.mxu0 0
        %504 = vmatprep.subr.bf16.mxu0 0
        %505 = vmatpush1.bf16.msra.mxu0 0
        %506 = vmatprep.subr.bf16.mxu0 0
        %507 = vmatpush1.bf16.msra.mxu0 0
        %508 = vmatprep.subr.bf16.mxu0 0
        %509 = vmatpush1.bf16.msra.mxu0 0
        %510 = vmatprep.subr.bf16.mxu0 0
        %511 = vmatpush1.bf16.msra.mxu0 0
        %512 = vmatprep.mubr.bf16.mxu0 0
        %513 = vmatmul.mubr.bf16.gmra.mrb[0].mxu0 %v264
        %v514 = vpop.f32.mrb[0].mxu0
        %v515 = vadd.f32 %v303, %v514
        %v516 = vpop.f32.mrb[0].mxu0
        %v517 = vadd.f32 %v307, %v516
        %v518 = vpop.f32.mrb[0].mxu0
        %v519 = vadd.f32 %v303, %v518
        %v520 = vpop.f32.mrb[0].mxu0
        %v521 = vadd.f32 %v307, %v520
        %522 = vmatprep.mubr.bf16.mxu0 0
        %523 = vmatmul.mubr.bf16.gmra.mrb[0].mxu0 %v265
        %v524 = vpop.f32.mrb[0].mxu0
        %v525 = vadd.f32 %v303, %v524
        %v526 = vpop.f32.mrb[0].mxu0
        %v527 = vadd.f32 %v307, %v526
        %v528 = vpop.f32.mrb[0].mxu0
        %v529 = vadd.f32 %v303, %v528
        %v530 = vpop.f32.mrb[0].mxu0
        %v531 = vadd.f32 %v307, %v530
        %532 = vdwg.mxu0
        %533 = vmatprep.subr.bf16.mxu0 %v419
        %534 = vmatpush1.bf16.msra.mxu0 %v418
        %535 = vmatprep.subr.bf16.mxu0 %v423
        %536 = vmatpush1.bf16.msra.mxu0 %v422
        %537 = vmatprep.subr.bf16.mxu0 %v427
        %538 = vmatpush1.bf16.msra.mxu0 %v426
        %539 = vmatprep.subr.bf16.mxu0 %v431
        %540 = vmatpush1.bf16.msra.mxu0 %v430
        %541 = vmatprep.subr.bf16.mxu0 %v435
        %542 = vmatpush1.bf16.msra.mxu0 %v434
        %543 = vmatprep.subr.bf16.mxu0 %v439
        %544 = vmatpush1.bf16.msra.mxu0 %v438
        %545 = vmatprep.subr.bf16.mxu0 %v443
        %546 = vmatpush1.bf16.msra.mxu0 %v442
        %547 = vmatprep.subr.bf16.mxu0 %v447
        %548 = vmatpush1.bf16.msra.mxu0 %v446
        %549 = vmatprep.subr.bf16.mxu0 0
        %550 = vmatpush1.bf16.msra.mxu0 0
        %551 = vmatprep.subr.bf16.mxu0 0
        %552 = vmatpush1.bf16.msra.mxu0 0
        %553 = vmatprep.subr.bf16.mxu0 0
        %554 = vmatpush1.bf16.msra.mxu0 0
        %555 = vmatprep.subr.bf16.mxu0 0
        %556 = vmatpush1.bf16.msra.mxu0 0
        %557 = vmatprep.subr.bf16.mxu0 0
        %558 = vmatpush1.bf16.msra.mxu0 0
        %559 = vmatprep.subr.bf16.mxu0 0
        %560 = vmatpush1.bf16.msra.mxu0 0
        %561 = vmatprep.subr.bf16.mxu0 0
        %562 = vmatpush1.bf16.msra.mxu0 0
        %563 = vmatprep.subr.bf16.mxu0 0
        %564 = vmatpush1.bf16.msra.mxu0 0
        %565 = vmatprep.mubr.bf16.mxu0 0
        %566 = vmatmul.mubr.bf16.gmra.mrb[0].mxu0 %v264
        %v567 = vpop.f32.mrb[0].mxu0
        %v568 = vadd.f32 %v311, %v567
        %v569 = vpop.f32.mrb[0].mxu0
        %v570 = vadd.f32 %v315, %v569
        %v571 = vpop.f32.mrb[0].mxu0
        %v572 = vadd.f32 %v311, %v571
        %v573 = vpop.f32.mrb[0].mxu0
        %v574 = vadd.f32 %v315, %v573
        %575 = vmatprep.mubr.bf16.mxu0 0
        %576 = vmatmul.mubr.bf16.gmra.mrb[0].mxu0 %v265
        %v577 = vpop.f32.mrb[0].mxu0
        %v578 = vadd.f32 %v311, %v577
        %v579 = vpop.f32.mrb[0].mxu0
        %v580 = vadd.f32 %v315, %v579
        %v581 = vpop.f32.mrb[0].mxu0
        %v582 = vadd.f32 %v311, %v581
        %v583 = vpop.f32.mrb[0].mxu0
        %v584 = vadd.f32 %v315, %v583
        %585 = vdwg.mxu0
        %v586 = vld [vmem:[%s2 + $0x1] sm:$0x1]
        %v587 = vld [vmem:[%s2 + $0x3] sm:$0x1]
        %v588 = vld [vmem:[%s3] sm:$0xf]
        %v589 = vld [vmem:[%s3 + $0x4] sm:$0xf]
        %v590 = vld [vmem:[%s3 + $0x8] sm:$0xf]
        %v591 = vld [vmem:[%s3 + $0xc] sm:$0xf]
        %v592 = vld [vmem:[%s3 + $0x10] sm:$0xf]
        %v593 = vld [vmem:[%s3 + $0x14] sm:$0xf]
        %v594 = vld [vmem:[%s3 + $0x18] sm:$0xf]
        %v595 = vld [vmem:[%s3 + $0x1c] sm:$0xf]
        %v596 = vld [vmem:[%s3 + $0x20] sm:$0xf]
        %v597 = vld [vmem:[%s3 + $0x24] sm:$0xf]
        %v598 = vld [vmem:[%s3 + $0x28] sm:$0xf]
        %v599 = vld [vmem:[%s3 + $0x2c] sm:$0xf]
        %v600 = vld [vmem:[%s3 + $0x30] sm:$0xf]
        %v601 = vld [vmem:[%s3 + $0x34] sm:$0xf]
        %v602 = vld [vmem:[%s3 + $0x38] sm:$0xf]
        %v603 = vld [vmem:[%s3 + $0x3c] sm:$0xf]
        %v604 = vsub.f32 %v515, %v568
        %v605 = vsub.f32 %v519, %v572
        %v606 = vsub.f32 %v525, %v578
        %v607 = vsub.f32 %v529, %v582
        %v608 = vmul.f32 %v604, %v604
        %v609 = vmul.f32 %v605, %v605
        %v610 = vmul.f32 %v606, %v606
        %v611 = vmul.f32 %v607, %v607
        %v612 = vpack.c.bf16 %v609, %v608
        %v613 = vpack.c.bf16 %v611, %v610
        %v630 = vunpack.c.l.b16 %v588
        %v631 = vunpack.c.l.b16 %v589
        %v632 = vunpack.c.l.b16 %v590
        %v633 = vunpack.c.l.b16 %v591
        %v634 = vunpack.c.l.b16 %v592
        %v635 = vunpack.c.l.b16 %v593
        %v636 = vunpack.c.l.b16 %v594
        %v637 = vunpack.c.l.b16 %v595
        %v638 = vunpack.c.l.b16 %v596
        %v639 = vunpack.c.l.b16 %v597
        %v640 = vunpack.c.l.b16 %v598
        %v641 = vunpack.c.l.b16 %v599
        %v642 = vunpack.c.l.b16 %v600
        %v643 = vunpack.c.l.b16 %v601
        %v644 = vunpack.c.l.b16 %v602
        %v645 = vunpack.c.l.b16 %v603
        %v646 = vpack.c.b16 %v631, %v630
        %v647 = vpack.c.b16 %v633, %v632
        %v648 = vpack.c.b16 %v635, %v634
        %v649 = vpack.c.b16 %v637, %v636
        %v650 = vpack.c.b16 %v639, %v638
        %v651 = vpack.c.b16 %v641, %v640
        %v652 = vpack.c.b16 %v643, %v642
        %v653 = vpack.c.b16 %v645, %v644
        %662 = vmatprep.subr.bf16.mxu0 0
        %663 = vmatpush1.bf16.msra.mxu0 %v646
        %664 = vmatprep.subr.bf16.mxu0 0
        %665 = vmatpush1.bf16.msra.mxu0 %v647
        %666 = vmatprep.subr.bf16.mxu0 0
        %667 = vmatpush1.bf16.msra.mxu0 %v648
        %668 = vmatprep.subr.bf16.mxu0 0
        %669 = vmatpush1.bf16.msra.mxu0 %v649
        %670 = vmatprep.subr.bf16.mxu0 0
        %671 = vmatpush1.bf16.msra.mxu0 %v650
        %672 = vmatprep.subr.bf16.mxu0 0
        %673 = vmatpush1.bf16.msra.mxu0 %v651
        %674 = vmatprep.subr.bf16.mxu0 0
        %675 = vmatpush1.bf16.msra.mxu0 %v652
        %676 = vmatprep.subr.bf16.mxu0 0
        %677 = vmatpush1.bf16.msra.mxu0 %v653
        %678 = vmatprep.subr.bf16.mxu0 0
        %679 = vmatpush1.bf16.msra.mxu0 0
        %680 = vmatprep.subr.bf16.mxu0 0
        %681 = vmatpush1.bf16.msra.mxu0 0
        %682 = vmatprep.subr.bf16.mxu0 0
        %683 = vmatpush1.bf16.msra.mxu0 0
        %684 = vmatprep.subr.bf16.mxu0 0
        %685 = vmatpush1.bf16.msra.mxu0 0
        %686 = vmatprep.subr.bf16.mxu0 0
        %687 = vmatpush1.bf16.msra.mxu0 0
        %688 = vmatprep.subr.bf16.mxu0 0
        %689 = vmatpush1.bf16.msra.mxu0 0
        %690 = vmatprep.subr.bf16.mxu0 0
        %691 = vmatpush1.bf16.msra.mxu0 0
        %692 = vmatprep.subr.bf16.mxu0 0
        %693 = vmatpush1.bf16.msra.mxu0 0
        %694 = vmatprep.mubr.bf16.mxu0 0
        %695 = vmatmul.mubr.bf16.gmra.mrb[0].mxu0 %v612
        %v696 = vpop.f32.mrb[0].mxu0
        %v697 = vadd.f32 0.0, %v696
        %v698 = vpop.f32.mrb[0].mxu0
        %v699 = vpop.f32.mrb[0].mxu0
        %v700 = vadd.f32 0.0, %v699
        %v701 = vpop.f32.mrb[0].mxu0
        %702 = vmatprep.mubr.bf16.mxu0 0
        %703 = vmatmul.mubr.bf16.gmra.mrb[0].mxu0 %v613
        %v704 = vpop.f32.mrb[0].mxu0
        %v705 = vadd.f32 0.0, %v704
        %v706 = vpop.f32.mrb[0].mxu0
        %v707 = vpop.f32.mrb[0].mxu0
        %v708 = vadd.f32 0.0, %v707
        %v709 = vpop.f32.mrb[0].mxu0
        %710 = vdwg.mxu0
        %v711 = vmul.f32 %v697, 0.0625
        %v712 = vmul.f32 %v700, 0.0625
        %v713 = vmul.f32 %v705, 0.0625
        %v714 = vmul.f32 %v708, 0.0625
        %v715 = vadd.f32 %v711, 1e-05
        %v716 = vadd.f32 %v712, 1e-05
        %v717 = vadd.f32 %v713, 1e-05
        %v718 = vadd.f32 %v714, 1e-05
        %v719 = vrsqrt.pop %v715
        %v720 = vrsqrt.pop %v716
        %v721 = vrsqrt.pop %v717
        %v722 = vrsqrt.pop %v718
        %v723 = vmul.f32 %v604, %v719
        %v724 = vmul.f32 %v605, %v720
        %v725 = vmul.f32 %v606, %v721
        %v726 = vmul.f32 %v607, %v722
        %v727 = vlaneseq
        %v728 = vshrl.u32 %v727, 7
        %v729 = vsub.s32 0, %v728
        %v730 = vrot.slane %v586, %v729
        %v731 = vmul.f32 %v723, %v730
        %v732 = vmul.f32 %v724, %v730
        %v733 = vmul.f32 %v725, %v730
        %v734 = vmul.f32 %v726, %v730
        %v735 = vlaneseq
        %v736 = vshrl.u32 %v735, 7
        %v737 = vsub.s32 0, %v736
        %v738 = vrot.slane %v587, %v737
        %v739 = vadd.f32 %v731, %v738
        %v740 = vadd.f32 %v732, %v738
        %v741 = vadd.f32 %v733, %v738
        %v742 = vadd.f32 %v734, %v738
        %v747 = vcombine.high %v739, %v739
        %v749 = vunpack.c.l.s4 1966171168
        %v750 = vunpack.c.0.s8 %v749
        %v751 = vlaneseq
        %v752 = vshrl.u32 %v751, 7
        %v753 = vsub.s32 %v750, %v752
        %v754 = vrot.slane %v739, %v753
        %v756 = vunpack.c.l.s4 1966171168
        %v757 = vunpack.c.0.s8 %v756
        %v758 = vlaneseq
        %v759 = vshrl.u32 %v758, 7
        %v760 = vsub.s32 %v757, %v759
        %v761 = vrot.slane %v747, %v760
        %v762 = vcombine.high %v754, %v754
        %v763 = vcombine.high %v761, %v761
        %v765 = vunpack.c.l.s4 1966171168
        %v766 = vunpack.c.0.s8 %v765
        %v767 = vlaneseq
        %v768 = vshrl.u32 %v767, 7
        %v769 = vsub.s32 %v766, %v768
        %v770 = vrot.slane %v754, %v769
        %v772 = vunpack.c.l.s4 1966171168
        %v773 = vunpack.c.0.s8 %v772
        %v774 = vlaneseq
        %v775 = vshrl.u32 %v774, 7
        %v776 = vsub.s32 %v773, %v775
        %v777 = vrot.slane %v761, %v776
        %v779 = vunpack.c.l.s4 1966171168
        %v780 = vunpack.c.0.s8 %v779
        %v781 = vlaneseq
        %v782 = vshrl.u32 %v781, 7
        %v783 = vsub.s32 %v780, %v782
        %v784 = vrot.slane %v762, %v783
        %v786 = vunpack.c.l.s4 1966171168
        %v787 = vunpack.c.0.s8 %v786
        %v788 = vlaneseq
        %v789 = vshrl.u32 %v788, 7
        %v790 = vsub.s32 %v787, %v789
        %v791 = vrot.slane %v763, %v790
        %v792 = vcombine.high %v770, %v770
        %v793 = vcombine.high %v777, %v777
        %v794 = vcombine.high %v784, %v784
        %v795 = vcombine.high %v791, %v791
        %v796 = vcombine.high %v740, %v740
        %v798 = vunpack.c.l.s4 1966171168
        %v799 = vunpack.c.0.s8 %v798
        %v800 = vlaneseq
        %v801 = vshrl.u32 %v800, 7
        %v802 = vsub.s32 %v799, %v801
        %v803 = vrot.slane %v740, %v802
        %v805 = vunpack.c.l.s4 1966171168
        %v806 = vunpack.c.0.s8 %v805
        %v807 = vlaneseq
        %v808 = vshrl.u32 %v807, 7
        %v809 = vsub.s32 %v806, %v808
        %v810 = vrot.slane %v796, %v809
        %v811 = vcombine.high %v803, %v803
        %v812 = vcombine.high %v810, %v810
        %v814 = vunpack.c.l.s4 1966171168
        %v815 = vunpack.c.0.s8 %v814
        %v816 = vlaneseq
        %v817 = vshrl.u32 %v816, 7
        %v818 = vsub.s32 %v815, %v817
        %v819 = vrot.slane %v803, %v818
        %v821 = vunpack.c.l.s4 1966171168
        %v822 = vunpack.c.0.s8 %v821
        %v823 = vlaneseq
        %v824 = vshrl.u32 %v823, 7
        %v825 = vsub.s32 %v822, %v824
        %v826 = vrot.slane %v810, %v825
        %v828 = vunpack.c.l.s4 1966171168
        %v829 = vunpack.c.0.s8 %v828
        %v830 = vlaneseq
        %v831 = vshrl.u32 %v830, 7
        %v832 = vsub.s32 %v829, %v831
        %v833 = vrot.slane %v811, %v832
        %v835 = vunpack.c.l.s4 1966171168
        %v836 = vunpack.c.0.s8 %v835
        %v837 = vlaneseq
        %v838 = vshrl.u32 %v837, 7
        %v839 = vsub.s32 %v836, %v838
        %v840 = vrot.slane %v812, %v839
        %v841 = vcombine.high %v819, %v819
        %v842 = vcombine.high %v826, %v826
        %v843 = vcombine.high %v833, %v833
        %v844 = vcombine.high %v840, %v840
        %v845 = vcombine.high %v741, %v741
        %v847 = vunpack.c.l.s4 1966171168
        %v848 = vunpack.c.0.s8 %v847
        %v849 = vlaneseq
        %v850 = vshrl.u32 %v849, 7
        %v851 = vsub.s32 %v848, %v850
        %v852 = vrot.slane %v741, %v851
        %v854 = vunpack.c.l.s4 1966171168
        %v855 = vunpack.c.0.s8 %v854
        %v856 = vlaneseq
        %v857 = vshrl.u32 %v856, 7
        %v858 = vsub.s32 %v855, %v857
        %v859 = vrot.slane %v845, %v858
        %v860 = vcombine.high %v852, %v852
        %v861 = vcombine.high %v859, %v859
        %v863 = vunpack.c.l.s4 1966171168
        %v864 = vunpack.c.0.s8 %v863
        %v865 = vlaneseq
        %v866 = vshrl.u32 %v865, 7
        %v867 = vsub.s32 %v864, %v866
        %v868 = vrot.slane %v852, %v867
        %v870 = vunpack.c.l.s4 1966171168
        %v871 = vunpack.c.0.s8 %v870
        %v872 = vlaneseq
        %v873 = vshrl.u32 %v872, 7
        %v874 = vsub.s32 %v871, %v873
        %v875 = vrot.slane %v859, %v874
        %v877 = vunpack.c.l.s4 1966171168
        %v878 = vunpack.c.0.s8 %v877
        %v879 = vlaneseq
        %v880 = vshrl.u32 %v879, 7
        %v881 = vsub.s32 %v878, %v880
        %v882 = vrot.slane %v860, %v881
        %v884 = vunpack.c.l.s4 1966171168
        %v885 = vunpack.c.0.s8 %v884
        %v886 = vlaneseq
        %v887 = vshrl.u32 %v886, 7
        %v888 = vsub.s32 %v885, %v887
        %v889 = vrot.slane %v861, %v888
        %v890 = vcombine.high %v868, %v868
        %v891 = vcombine.high %v875, %v875
        %v892 = vcombine.high %v882, %v882
        %v893 = vcombine.high %v889, %v889
        %v894 = vcombine.high %v742, %v742
        %v896 = vunpack.c.l.s4 1966171168
        %v897 = vunpack.c.0.s8 %v896
        %v898 = vlaneseq
        %v899 = vshrl.u32 %v898, 7
        %v900 = vsub.s32 %v897, %v899
        %v901 = vrot.slane %v742, %v900
        %v903 = vunpack.c.l.s4 1966171168
        %v904 = vunpack.c.0.s8 %v903
        %v905 = vlaneseq
        %v906 = vshrl.u32 %v905, 7
        %v907 = vsub.s32 %v904, %v906
        %v908 = vrot.slane %v894, %v907
        %v909 = vcombine.high %v901, %v901
        %v910 = vcombine.high %v908, %v908
        %v912 = vunpack.c.l.s4 1966171168
        %v913 = vunpack.c.0.s8 %v912
        %v914 = vlaneseq
        %v915 = vshrl.u32 %v914, 7
        %v916 = vsub.s32 %v913, %v915
        %v917 = vrot.slane %v901, %v916
        %v919 = vunpack.c.l.s4 1966171168
        %v920 = vunpack.c.0.s8 %v919
        %v921 = vlaneseq
        %v922 = vshrl.u32 %v921, 7
        %v923 = vsub.s32 %v920, %v922
        %v924 = vrot.slane %v908, %v923
        %v926 = vunpack.c.l.s4 1966171168
        %v927 = vunpack.c.0.s8 %v926
        %v928 = vlaneseq
        %v929 = vshrl.u32 %v928, 7
        %v930 = vsub.s32 %v927, %v929
        %v931 = vrot.slane %v909, %v930
        %v933 = vunpack.c.l.s4 1966171168
        %v934 = vunpack.c.0.s8 %v933
        %v935 = vlaneseq
        %v936 = vshrl.u32 %v935, 7
        %v937 = vsub.s32 %v934, %v936
        %v938 = vrot.slane %v910, %v937
        %v939 = vcombine.high %v917, %v917
        %v940 = vcombine.high %v924, %v924
        %v941 = vcombine.high %v931, %v931
        %v942 = vcombine.high %v938, %v938
        %975 = vst [vmem:[%s256] sm:$0x1] %v770
        %976 = vst [vmem:[%s256 + $0x2] sm:$0x1] %v784
        %977 = vst [vmem:[%s256 + $0x4] sm:$0x1] %v792
        %978 = vst [vmem:[%s256 + $0x6] sm:$0x1] %v794
        %979 = vst [vmem:[%s256 + $0x8] sm:$0x1] %v777
        %980 = vst [vmem:[%s256 + $0xa] sm:$0x1] %v791
        %981 = vst [vmem:[%s256 + $0xc] sm:$0x1] %v793
        %982 = vst [vmem:[%s256 + $0xe] sm:$0x1] %v795
        %983 = vst [vmem:[%s256 + $0x10] sm:$0x1] %v819
        %984 = vst [vmem:[%s256 + $0x12] sm:$0x1] %v833
        %985 = vst [vmem:[%s256 + $0x14] sm:$0x1] %v841
        %986 = vst [vmem:[%s256 + $0x16] sm:$0x1] %v843
        %987 = vst [vmem:[%s256 + $0x18] sm:$0x1] %v826
        %988 = vst [vmem:[%s256 + $0x1a] sm:$0x1] %v840
        %989 = vst [vmem:[%s256 + $0x1c] sm:$0x1] %v842
        %990 = vst [vmem:[%s256 + $0x1e] sm:$0x1] %v844
        %991 = vst [vmem:[%s256 + $0x20] sm:$0x1] %v868
        %992 = vst [vmem:[%s256 + $0x22] sm:$0x1] %v882
        %993 = vst [vmem:[%s256 + $0x24] sm:$0x1] %v890
        %994 = vst [vmem:[%s256 + $0x26] sm:$0x1] %v892
        %995 = vst [vmem:[%s256 + $0x28] sm:$0x1] %v875
        %996 = vst [vmem:[%s256 + $0x2a] sm:$0x1] %v889
        %997 = vst [vmem:[%s256 + $0x2c] sm:$0x1] %v891
        %998 = vst [vmem:[%s256 + $0x2e] sm:$0x1] %v893
        %999 = vst [vmem:[%s256 + $0x30] sm:$0x1] %v917
        %1000 = vst [vmem:[%s256 + $0x32] sm:$0x1] %v931
        %1001 = vst [vmem:[%s256 + $0x34] sm:$0x1] %v939
        %1002 = vst [vmem:[%s256 + $0x36] sm:$0x1] %v941
        %1003 = vst [vmem:[%s256 + $0x38] sm:$0x1] %v924
        %1004 = vst [vmem:[%s256 + $0x3a] sm:$0x1] %v938
        %1005 = vst [vmem:[%s256 + $0x3c] sm:$0x1] %v940
        %1006 = vst [vmem:[%s256 + $0x3e] sm:$0x1] %v942
        %v1007 = vsub.f32 %v517, %v570
        %v1008 = vsub.f32 %v521, %v574
        %v1009 = vsub.f32 %v527, %v580
        %v1010 = vsub.f32 %v531, %v584
        %v1011 = vmul.f32 %v1007, %v1007
        %v1012 = vmul.f32 %v1008, %v1008
        %v1013 = vmul.f32 %v1009, %v1009
        %v1014 = vmul.f32 %v1010, %v1010
        %v1015 = vpack.c.bf16 %v1012, %v1011
        %v1016 = vpack.c.bf16 %v1014, %v1013
        %1017 = vmatprep.subr.bf16.mxu0 0
        %1018 = vmatpush1.bf16.msra.mxu0 %v646
        %1019 = vmatprep.subr.bf16.mxu0 0
        %1020 = vmatpush1.bf16.msra.mxu0 %v647
        %1021 = vmatprep.subr.bf16.mxu0 0
        %1022 = vmatpush1.bf16.msra.mxu0 %v648
        %1023 = vmatprep.subr.bf16.mxu0 0
        %1024 = vmatpush1.bf16.msra.mxu0 %v649
        %1025 = vmatprep.subr.bf16.mxu0 0
        %1026 = vmatpush1.bf16.msra.mxu0 %v650
        %1027 = vmatprep.subr.bf16.mxu0 0
        %1028 = vmatpush1.bf16.msra.mxu0 %v651
        %1029 = vmatprep.subr.bf16.mxu0 0
        %1030 = vmatpush1.bf16.msra.mxu0 %v652
        %1031 = vmatprep.subr.bf16.mxu0 0
        %1032 = vmatpush1.bf16.msra.mxu0 %v653
        %1033 = vmatprep.subr.bf16.mxu0 0
        %1034 = vmatpush1.bf16.msra.mxu0 0
        %1035 = vmatprep.subr.bf16.mxu0 0
        %1036 = vmatpush1.bf16.msra.mxu0 0
        %1037 = vmatprep.subr.bf16.mxu0 0
        %1038 = vmatpush1.bf16.msra.mxu0 0
        %1039 = vmatprep.subr.bf16.mxu0 0
        %1040 = vmatpush1.bf16.msra.mxu0 0
        %1041 = vmatprep.subr.bf16.mxu0 0
        %1042 = vmatpush1.bf16.msra.mxu0 0
        %1043 = vmatprep.subr.bf16.mxu0 0
        %1044 = vmatpush1.bf16.msra.mxu0 0
        %1045 = vmatprep.subr.bf16.mxu0 0
        %1046 = vmatpush1.bf16.msra.mxu0 0
        %1047 = vmatprep.subr.bf16.mxu0 0
        %1048 = vmatpush1.bf16.msra.mxu0 0
        %1049 = vmatprep.mubr.bf16.mxu0 0
        %1050 = vmatmul.mubr.bf16.gmra.mrb[0].mxu0 %v1015
        %v1051 = vpop.f32.mrb[0].mxu0
        %v1052 = vadd.f32 0.0, %v1051
        %v1053 = vpop.f32.mrb[0].mxu0
        %v1054 = vpop.f32.mrb[0].mxu0
        %v1055 = vadd.f32 0.0, %v1054
        %v1056 = vpop.f32.mrb[0].mxu0
        %1057 = vmatprep.mubr.bf16.mxu0 0
        %1058 = vmatmul.mubr.bf16.gmra.mrb[0].mxu0 %v1016
        %v1059 = vpop.f32.mrb[0].mxu0
        %v1060 = vadd.f32 0.0, %v1059
        %v1061 = vpop.f32.mrb[0].mxu0
        %v1062 = vpop.f32.mrb[0].mxu0
        %v1063 = vadd.f32 0.0, %v1062
        %v1064 = vpop.f32.mrb[0].mxu0
        %1065 = vdwg.mxu0
        %v1066 = vmul.f32 %v1052, 0.0625
        %v1067 = vmul.f32 %v1055, 0.0625
        %v1068 = vmul.f32 %v1060, 0.0625
        %v1069 = vmul.f32 %v1063, 0.0625
        %v1070 = vadd.f32 %v1066, 1e-05
        %v1071 = vadd.f32 %v1067, 1e-05
        %v1072 = vadd.f32 %v1068, 1e-05
        %v1073 = vadd.f32 %v1069, 1e-05
        %v1074 = vrsqrt.pop %v1070
        %v1075 = vrsqrt.pop %v1071
        %v1076 = vrsqrt.pop %v1072
        %v1077 = vrsqrt.pop %v1073
        %v1078 = vmul.f32 %v1007, %v1074
        %v1079 = vmul.f32 %v1008, %v1075
        %v1080 = vmul.f32 %v1009, %v1076
        %v1081 = vmul.f32 %v1010, %v1077
        %v1082 = vmul.f32 %v1078, %v730
        %v1083 = vmul.f32 %v1079, %v730
        %v1084 = vmul.f32 %v1080, %v730
        %v1085 = vmul.f32 %v1081, %v730
        %v1086 = vadd.f32 %v1082, %v738
        %v1087 = vadd.f32 %v1083, %v738
        %v1088 = vadd.f32 %v1084, %v738
        %v1089 = vadd.f32 %v1085, %v738
        %v1094 = vcombine.high %v1086, %v1086
        %v1096 = vunpack.c.l.s4 1966171168
        %v1097 = vunpack.c.0.s8 %v1096
        %v1098 = vlaneseq
        %v1099 = vshrl.u32 %v1098, 7
        %v1100 = vsub.s32 %v1097, %v1099
        %v1101 = vrot.slane %v1086, %v1100
        %v1103 = vunpack.c.l.s4 1966171168
        %v1104 = vunpack.c.0.s8 %v1103
        %v1105 = vlaneseq
        %v1106 = vshrl.u32 %v1105, 7
        %v1107 = vsub.s32 %v1104, %v1106
        %v1108 = vrot.slane %v1094, %v1107
        %v1109 = vcombine.high %v1101, %v1101
        %v1110 = vcombine.high %v1108, %v1108
        %v1112 = vunpack.c.l.s4 1966171168
        %v1113 = vunpack.c.0.s8 %v1112
        %v1114 = vlaneseq
        %v1115 = vshrl.u32 %v1114, 7
        %v1116 = vsub.s32 %v1113, %v1115
        %v1117 = vrot.slane %v1101, %v1116
        %v1119 = vunpack.c.l.s4 1966171168
        %v1120 = vunpack.c.0.s8 %v1119
        %v1121 = vlaneseq
        %v1122 = vshrl.u32 %v1121, 7
        %v1123 = vsub.s32 %v1120, %v1122
        %v1124 = vrot.slane %v1108, %v1123
        %v1126 = vunpack.c.l.s4 1966171168
        %v1127 = vunpack.c.0.s8 %v1126
        %v1128 = vlaneseq
        %v1129 = vshrl.u32 %v1128, 7
        %v1130 = vsub.s32 %v1127, %v1129
        %v1131 = vrot.slane %v1109, %v1130
        %v1133 = vunpack.c.l.s4 1966171168
        %v1134 = vunpack.c.0.s8 %v1133
        %v1135 = vlaneseq
        %v1136 = vshrl.u32 %v1135, 7
        %v1137 = vsub.s32 %v1134, %v1136
        %v1138 = vrot.slane %v1110, %v1137
        %v1139 = vcombine.high %v1117, %v1117
        %v1140 = vcombine.high %v1124, %v1124
        %v1141 = vcombine.high %v1131, %v1131
        %v1142 = vcombine.high %v1138, %v1138
        %v1143 = vcombine.high %v1087, %v1087
        %v1145 = vunpack.c.l.s4 1966171168
        %v1146 = vunpack.c.0.s8 %v1145
        %v1147 = vlaneseq
        %v1148 = vshrl.u32 %v1147, 7
        %v1149 = vsub.s32 %v1146, %v1148
        %v1150 = vrot.slane %v1087, %v1149
        %v1152 = vunpack.c.l.s4 1966171168
        %v1153 = vunpack.c.0.s8 %v1152
        %v1154 = vlaneseq
        %v1155 = vshrl.u32 %v1154, 7
        %v1156 = vsub.s32 %v1153, %v1155
        %v1157 = vrot.slane %v1143, %v1156
        %v1158 = vcombine.high %v1150, %v1150
        %v1159 = vcombine.high %v1157, %v1157
        %v1161 = vunpack.c.l.s4 1966171168
        %v1162 = vunpack.c.0.s8 %v1161
        %v1163 = vlaneseq
        %v1164 = vshrl.u32 %v1163, 7
        %v1165 = vsub.s32 %v1162, %v1164
        %v1166 = vrot.slane %v1150, %v1165
        %v1168 = vunpack.c.l.s4 1966171168
        %v1169 = vunpack.c.0.s8 %v1168
        %v1170 = vlaneseq
        %v1171 = vshrl.u32 %v1170, 7
        %v1172 = vsub.s32 %v1169, %v1171
        %v1173 = vrot.slane %v1157, %v1172
        %v1175 = vunpack.c.l.s4 1966171168
        %v1176 = vunpack.c.0.s8 %v1175
        %v1177 = vlaneseq
        %v1178 = vshrl.u32 %v1177, 7
        %v1179 = vsub.s32 %v1176, %v1178
        %v1180 = vrot.slane %v1158, %v1179
        %v1182 = vunpack.c.l.s4 1966171168
        %v1183 = vunpack.c.0.s8 %v1182
        %v1184 = vlaneseq
        %v1185 = vshrl.u32 %v1184, 7
        %v1186 = vsub.s32 %v1183, %v1185
        %v1187 = vrot.slane %v1159, %v1186
        %v1188 = vcombine.high %v1166, %v1166
        %v1189 = vcombine.high %v1173, %v1173
        %v1190 = vcombine.high %v1180, %v1180
        %v1191 = vcombine.high %v1187, %v1187
        %v1192 = vcombine.high %v1088, %v1088
        %v1194 = vunpack.c.l.s4 1966171168
        %v1195 = vunpack.c.0.s8 %v1194
        %v1196 = vlaneseq
        %v1197 = vshrl.u32 %v1196, 7
        %v1198 = vsub.s32 %v1195, %v1197
        %v1199 = vrot.slane %v1088, %v1198
        %v1201 = vunpack.c.l.s4 1966171168
        %v1202 = vunpack.c.0.s8 %v1201
        %v1203 = vlaneseq
        %v1204 = vshrl.u32 %v1203, 7
        %v1205 = vsub.s32 %v1202, %v1204
        %v1206 = vrot.slane %v1192, %v1205
        %v1207 = vcombine.high %v1199, %v1199
        %v1208 = vcombine.high %v1206, %v1206
        %v1210 = vunpack.c.l.s4 1966171168
        %v1211 = vunpack.c.0.s8 %v1210
        %v1212 = vlaneseq
        %v1213 = vshrl.u32 %v1212, 7
        %v1214 = vsub.s32 %v1211, %v1213
        %v1215 = vrot.slane %v1199, %v1214
        %v1217 = vunpack.c.l.s4 1966171168
        %v1218 = vunpack.c.0.s8 %v1217
        %v1219 = vlaneseq
        %v1220 = vshrl.u32 %v1219, 7
        %v1221 = vsub.s32 %v1218, %v1220
        %v1222 = vrot.slane %v1206, %v1221
        %v1224 = vunpack.c.l.s4 1966171168
        %v1225 = vunpack.c.0.s8 %v1224
        %v1226 = vlaneseq
        %v1227 = vshrl.u32 %v1226, 7
        %v1228 = vsub.s32 %v1225, %v1227
        %v1229 = vrot.slane %v1207, %v1228
        %v1231 = vunpack.c.l.s4 1966171168
        %v1232 = vunpack.c.0.s8 %v1231
        %v1233 = vlaneseq
        %v1234 = vshrl.u32 %v1233, 7
        %v1235 = vsub.s32 %v1232, %v1234
        %v1236 = vrot.slane %v1208, %v1235
        %v1237 = vcombine.high %v1215, %v1215
        %v1238 = vcombine.high %v1222, %v1222
        %v1239 = vcombine.high %v1229, %v1229
        %v1240 = vcombine.high %v1236, %v1236
        %v1241 = vcombine.high %v1089, %v1089
        %v1243 = vunpack.c.l.s4 1966171168
        %v1244 = vunpack.c.0.s8 %v1243
        %v1245 = vlaneseq
        %v1246 = vshrl.u32 %v1245, 7
        %v1247 = vsub.s32 %v1244, %v1246
        %v1248 = vrot.slane %v1089, %v1247
        %v1250 = vunpack.c.l.s4 1966171168
        %v1251 = vunpack.c.0.s8 %v1250
        %v1252 = vlaneseq
        %v1253 = vshrl.u32 %v1252, 7
        %v1254 = vsub.s32 %v1251, %v1253
        %v1255 = vrot.slane %v1241, %v1254
        %v1256 = vcombine.high %v1248, %v1248
        %v1257 = vcombine.high %v1255, %v1255
        %v1259 = vunpack.c.l.s4 1966171168
        %v1260 = vunpack.c.0.s8 %v1259
        %v1261 = vlaneseq
        %v1262 = vshrl.u32 %v1261, 7
        %v1263 = vsub.s32 %v1260, %v1262
        %v1264 = vrot.slane %v1248, %v1263
        %v1266 = vunpack.c.l.s4 1966171168
        %v1267 = vunpack.c.0.s8 %v1266
        %v1268 = vlaneseq
        %v1269 = vshrl.u32 %v1268, 7
        %v1270 = vsub.s32 %v1267, %v1269
        %v1271 = vrot.slane %v1255, %v1270
        %v1273 = vunpack.c.l.s4 1966171168
        %v1274 = vunpack.c.0.s8 %v1273
        %v1275 = vlaneseq
        %v1276 = vshrl.u32 %v1275, 7
        %v1277 = vsub.s32 %v1274, %v1276
        %v1278 = vrot.slane %v1256, %v1277
        %v1280 = vunpack.c.l.s4 1966171168
        %v1281 = vunpack.c.0.s8 %v1280
        %v1282 = vlaneseq
        %v1283 = vshrl.u32 %v1282, 7
        %v1284 = vsub.s32 %v1281, %v1283
        %v1285 = vrot.slane %v1257, %v1284
        %v1286 = vcombine.high %v1264, %v1264
        %v1287 = vcombine.high %v1271, %v1271
        %v1288 = vcombine.high %v1278, %v1278
        %v1289 = vcombine.high %v1285, %v1285
        %1322 = vst [vmem:[%s256 + $0x1] sm:$0x1] %v1117
        %1323 = vst [vmem:[%s256 + $0x3] sm:$0x1] %v1131
        %1324 = vst [vmem:[%s256 + $0x5] sm:$0x1] %v1139
        %1325 = vst [vmem:[%s256 + $0x7] sm:$0x1] %v1141
        %1326 = vst [vmem:[%s256 + $0x9] sm:$0x1] %v1124
        %1327 = vst [vmem:[%s256 + $0xb] sm:$0x1] %v1138
        %1328 = vst [vmem:[%s256 + $0xd] sm:$0x1] %v1140
        %1329 = vst [vmem:[%s256 + $0xf] sm:$0x1] %v1142
        %1330 = vst [vmem:[%s256 + $0x11] sm:$0x1] %v1166
        %1331 = vst [vmem:[%s256 + $0x13] sm:$0x1] %v1180
        %1332 = vst [vmem:[%s256 + $0x15] sm:$0x1] %v1188
        %1333 = vst [vmem:[%s256 + $0x17] sm:$0x1] %v1190
        %1334 = vst [vmem:[%s256 + $0x19] sm:$0x1] %v1173
        %1335 = vst [vmem:[%s256 + $0x1b] sm:$0x1] %v1187
        %1336 = vst [vmem:[%s256 + $0x1d] sm:$0x1] %v1189
        %1337 = vst [vmem:[%s256 + $0x1f] sm:$0x1] %v1191
        %1338 = vst [vmem:[%s256 + $0x21] sm:$0x1] %v1215
        %1339 = vst [vmem:[%s256 + $0x23] sm:$0x1] %v1229
        %1340 = vst [vmem:[%s256 + $0x25] sm:$0x1] %v1237
        %1341 = vst [vmem:[%s256 + $0x27] sm:$0x1] %v1239
        %1342 = vst [vmem:[%s256 + $0x29] sm:$0x1] %v1222
        %1343 = vst [vmem:[%s256 + $0x2b] sm:$0x1] %v1236
        %1344 = vst [vmem:[%s256 + $0x2d] sm:$0x1] %v1238
        %1345 = vst [vmem:[%s256 + $0x2f] sm:$0x1] %v1240
        %1346 = vst [vmem:[%s256 + $0x31] sm:$0x1] %v1264
        %1347 = vst [vmem:[%s256 + $0x33] sm:$0x1] %v1278
        %1348 = vst [vmem:[%s256 + $0x35] sm:$0x1] %v1286
        %1349 = vst [vmem:[%s256 + $0x37] sm:$0x1] %v1288
        %1350 = vst [vmem:[%s256 + $0x39] sm:$0x1] %v1271
        %1351 = vst [vmem:[%s256 + $0x3b] sm:$0x1] %v1285
        %1352 = vst [vmem:[%s256 + $0x3d] sm:$0x1] %v1287
        %1353 = vst [vmem:[%s256 + $0x3f] sm:$0x1] %v1289
        %s1354 = sand.u32 %s128, 1
        %s1355 = sand.u32 %s128, 1
        %s1356 = smul.addr %s1355, 64
        %s1357 = scalar_lea.vmem [#allocation3], %s1356
        // Predicated region
        $region75: #{final_patch_expansion.1} parent=69 // pred_check
          %p1358 = pneg %p138
        $region76: #{final_patch_expansion.1} parent=69 // pred_check_branch
          %1360 = sbr.rel (%p1358) target = $region78
        $region77: #{final_patch_expansion.1} parent=69 // pred_region
          %s1361 = smul.u32 32, %s19
          %s1362 = smul.addr %s1361, 4
          %s1363 = sadd.s32 %s20, %s1362
          %s1364 = smul.addr %s1363, 2
          %s1365 = scalar_lea.vmem %s4, %s1364
          // Predicated region
          $region79: #{final_patch_expansion.1} parent=77 // pred_check
            _
          $region80: #{final_patch_expansion.1} parent=77 // pred_check_branch
            %1367 = sbr.rel (0) target = $region82
          $region81: #{final_patch_expansion.1} parent=77 // pred_region
            // Predicated region
            $region83: #{final_patch_expansion.1} parent=81 // pred_check
              _
            $region84: #{final_patch_expansion.1} parent=81 // pred_check_branch
              %1369 = sbr.rel target = $region86
            $region85: #{final_patch_expansion.1} parent=81 // pred_region
              // Predicated region
              $region98: #{final_patch_expansion.1} parent=85 // pred_check
                _
              $region99: #{final_patch_expansion.1} parent=85 // pred_check_branch
                %1446 = sbr.rel (0) target = $region101
              $region100: #{final_patch_expansion.1} parent=85 // pred_region
                loop: start=0, step=1, limit=1
                $region102: #{final_patch_expansion.1} parent=100 // loop_pre_header
                  _
                $region103: #{final_patch_expansion.1} parent=100 // loop_header
                  %s1448 = sphi 0, %s1452
                  %p1449 = scmp.ge.s32.totalorder %s1448, 1
                  %s1453 = sphi %s1357, %s1357
                  %s1454 = sphi %s1365, %s1365
                $region104: #{final_patch_expansion.1} parent=100 // loop_header_branch
                  %1451 = sbr.rel (%p1449) target = $region108
                $region105: #{final_patch_expansion.1} parent=100 // loop_body
                  _
                $region106: #{final_patch_expansion.1} parent=100 // loop_footer
                  %s1452 = sadd.s32 1, %s1448
                $region107: #{final_patch_expansion.1} parent=100 // loop_footer_branch
                  %1447 = sbr.rel target = $region103
                $region108: #{final_patch_expansion.1} parent=100 // loop_exit
                  _
                loop: start=0, step=1, limit=1
                $region109: #{final_patch_expansion.1} parent=100 // loop_pre_header
                  _
                $region110: #{final_patch_expansion.1} parent=100 // loop_header
                  %s1457 = sphi 0, %s1461
                  %p1458 = scmp.ge.s32.totalorder %s1457, 1
                  %s1462 = sphi %s1357, %s1357
                  %s1463 = sphi %s1365, %s1365
                $region111: #{final_patch_expansion.1} parent=100 // loop_header_branch
                  %1460 = sbr.rel (%p1458) target = $region115
                $region112: #{final_patch_expansion.1} parent=100 // loop_body
                  %v1464 = vld [vmem:[%s1462] sm:$0x3]
                  %1465 = vst [vmem:[%s1463] sm:$0x3] %v1464
                  %v1466 = vld [vmem:[%s1462 + $0x2] sm:$0x3]
                  %1467 = vst [vmem:[%s1463 + $0x8] sm:$0x3] %v1466
                  %v1468 = vld [vmem:[%s1462 + $0x4] sm:$0x3]
                  %1469 = vst [vmem:[%s1463 + $0x10] sm:$0x3] %v1468
                  %v1470 = vld [vmem:[%s1462 + $0x6] sm:$0x3]
                  %1471 = vst [vmem:[%s1463 + $0x18] sm:$0x3] %v1470
                  %v1472 = vld [vmem:[%s1462 + $0x8] sm:$0x3]
                  %1473 = vst [vmem:[%s1463 + $0x20] sm:$0x3] %v1472
                  %v1474 = vld [vmem:[%s1462 + $0xa] sm:$0x3]
                  %1475 = vst [vmem:[%s1463 + $0x28] sm:$0x3] %v1474
                  %v1476 = vld [vmem:[%s1462 + $0xc] sm:$0x3]
                  %1477 = vst [vmem:[%s1463 + $0x30] sm:$0x3] %v1476
                  %v1478 = vld [vmem:[%s1462 + $0xe] sm:$0x3]
                  %1479 = vst [vmem:[%s1463 + $0x38] sm:$0x3] %v1478
                  %v1480 = vld [vmem:[%s1462 + $0x10] sm:$0x3]
                  %1481 = vst [vmem:[%s1463 + $0x40] sm:$0x3] %v1480
                  %v1482 = vld [vmem:[%s1462 + $0x12] sm:$0x3]
                  %1483 = vst [vmem:[%s1463 + $0x48] sm:$0x3] %v1482
                  %v1484 = vld [vmem:[%s1462 + $0x14] sm:$0x3]
                  %1485 = vst [vmem:[%s1463 + $0x50] sm:$0x3] %v1484
                  %v1486 = vld [vmem:[%s1462 + $0x16] sm:$0x3]
                  %1487 = vst [vmem:[%s1463 + $0x58] sm:$0x3] %v1486
                  %v1488 = vld [vmem:[%s1462 + $0x18] sm:$0x3]
                  %1489 = vst [vmem:[%s1463 + $0x60] sm:$0x3] %v1488
                  %v1490 = vld [vmem:[%s1462 + $0x1a] sm:$0x3]
                  %1491 = vst [vmem:[%s1463 + $0x68] sm:$0x3] %v1490
                  %v1492 = vld [vmem:[%s1462 + $0x1c] sm:$0x3]
                  %1493 = vst [vmem:[%s1463 + $0x70] sm:$0x3] %v1492
                  %v1494 = vld [vmem:[%s1462 + $0x1e] sm:$0x3]
                  %1495 = vst [vmem:[%s1463 + $0x78] sm:$0x3] %v1494
                  %v1496 = vld [vmem:[%s1462 + $0x20] sm:$0x3]
                  %1497 = vst [vmem:[%s1463 + $0x80] sm:$0x3] %v1496
                  %v1498 = vld [vmem:[%s1462 + $0x22] sm:$0x3]
                  %1499 = vst [vmem:[%s1463 + $0x88] sm:$0x3] %v1498
                  %v1500 = vld [vmem:[%s1462 + $0x24] sm:$0x3]
                  %1501 = vst [vmem:[%s1463 + $0x90] sm:$0x3] %v1500
                  %v1502 = vld [vmem:[%s1462 + $0x26] sm:$0x3]
                  %1503 = vst [vmem:[%s1463 + $0x98] sm:$0x3] %v1502
                  %v1504 = vld [vmem:[%s1462 + $0x28] sm:$0x3]
                  %1505 = vst [vmem:[%s1463 + $0xa0] sm:$0x3] %v1504
                  %v1506 = vld [vmem:[%s1462 + $0x2a] sm:$0x3]
                  %1507 = vst [vmem:[%s1463 + $0xa8] sm:$0x3] %v1506
                  %v1508 = vld [vmem:[%s1462 + $0x2c] sm:$0x3]
                  %1509 = vst [vmem:[%s1463 + $0xb0] sm:$0x3] %v1508
                  %v1510 = vld [vmem:[%s1462 + $0x2e] sm:$0x3]
                  %1511 = vst [vmem:[%s1463 + $0xb8] sm:$0x3] %v1510
                  %v1512 = vld [vmem:[%s1462 + $0x30] sm:$0x3]
                  %1513 = vst [vmem:[%s1463 + $0xc0] sm:$0x3] %v1512
                  %v1514 = vld [vmem:[%s1462 + $0x32] sm:$0x3]
                  %1515 = vst [vmem:[%s1463 + $0xc8] sm:$0x3] %v1514
                  %v1516 = vld [vmem:[%s1462 + $0x34] sm:$0x3]
                  %1517 = vst [vmem:[%s1463 + $0xd0] sm:$0x3] %v1516
                  %v1518 = vld [vmem:[%s1462 + $0x36] sm:$0x3]
                  %1519 = vst [vmem:[%s1463 + $0xd8] sm:$0x3] %v1518
                  %v1520 = vld [vmem:[%s1462 + $0x38] sm:$0x3]
                  %1521 = vst [vmem:[%s1463 + $0xe0] sm:$0x3] %v1520
                  %v1522 = vld [vmem:[%s1462 + $0x3a] sm:$0x3]
                  %1523 = vst [vmem:[%s1463 + $0xe8] sm:$0x3] %v1522
                  %v1524 = vld [vmem:[%s1462 + $0x3c] sm:$0x3]
                  %1525 = vst [vmem:[%s1463 + $0xf0] sm:$0x3] %v1524
                  %v1526 = vld [vmem:[%s1462 + $0x3e] sm:$0x3]
                  %1527 = vst [vmem:[%s1463 + $0xf8] sm:$0x3] %v1526
                $region113: #{final_patch_expansion.1} parent=100 // loop_footer
                  %s1461 = sadd.s32 1, %s1457
                $region114: #{final_patch_expansion.1} parent=100 // loop_footer_branch
                  %1456 = sbr.rel target = $region110
                $region115: #{final_patch_expansion.1} parent=100 // loop_exit
                  _
              $region101: #{final_patch_expansion.1} parent=85 // pred_fallthru
                _
            $region86: #{final_patch_expansion.1} parent=81 // pred_fallthru
              _
            // Predicated region
            $region87: #{final_patch_expansion.1} parent=81 // pred_check
              _
            $region88: #{final_patch_expansion.1} parent=81 // pred_check_branch
              %1371 = sbr.rel (0) target = $region90
            $region89: #{final_patch_expansion.1} parent=81 // pred_region
              loop: start=0, step=1, limit=1
              $region91: #{final_patch_expansion.1} parent=89 // loop_pre_header
                _
              $region92: #{final_patch_expansion.1} parent=89 // loop_header
                %s1374 = sphi 0, %s1378
                %p1375 = scmp.ge.s32.totalorder %s1374, 1
                %s1379 = sphi %s1357, %s1357
                %s1380 = sphi %s1365, %s1365
              $region93: #{final_patch_expansion.1} parent=89 // loop_header_branch
                %1377 = sbr.rel (%p1375) target = $region97
              $region94: #{final_patch_expansion.1} parent=89 // loop_body
                %v1381 = vld [vmem:[%s1379] sm:$0x3]
                %1382 = vst [vmem:[%s1380] sm:$0x3] %v1381
                %v1383 = vld [vmem:[%s1379 + $0x2] sm:$0x3]
                %1384 = vst [vmem:[%s1380 + $0x8] sm:$0x3] %v1383
                %v1385 = vld [vmem:[%s1379 + $0x4] sm:$0x3]
                %1386 = vst [vmem:[%s1380 + $0x10] sm:$0x3] %v1385
                %v1387 = vld [vmem:[%s1379 + $0x6] sm:$0x3]
                %1388 = vst [vmem:[%s1380 + $0x18] sm:$0x3] %v1387
                %v1389 = vld [vmem:[%s1379 + $0x8] sm:$0x3]
                %1390 = vst [vmem:[%s1380 + $0x20] sm:$0x3] %v1389
                %v1391 = vld [vmem:[%s1379 + $0xa] sm:$0x3]
                %1392 = vst [vmem:[%s1380 + $0x28] sm:$0x3] %v1391
                %v1393 = vld [vmem:[%s1379 + $0xc] sm:$0x3]
                %1394 = vst [vmem:[%s1380 + $0x30] sm:$0x3] %v1393
                %v1395 = vld [vmem:[%s1379 + $0xe] sm:$0x3]
                %1396 = vst [vmem:[%s1380 + $0x38] sm:$0x3] %v1395
                %v1397 = vld [vmem:[%s1379 + $0x10] sm:$0x3]
                %1398 = vst [vmem:[%s1380 + $0x40] sm:$0x3] %v1397
                %v1399 = vld [vmem:[%s1379 + $0x12] sm:$0x3]
                %1400 = vst [vmem:[%s1380 + $0x48] sm:$0x3] %v1399
                %v1401 = vld [vmem:[%s1379 + $0x14] sm:$0x3]
                %1402 = vst [vmem:[%s1380 + $0x50] sm:$0x3] %v1401
                %v1403 = vld [vmem:[%s1379 + $0x16] sm:$0x3]
                %1404 = vst [vmem:[%s1380 + $0x58] sm:$0x3] %v1403
                %v1405 = vld [vmem:[%s1379 + $0x18] sm:$0x3]
                %1406 = vst [vmem:[%s1380 + $0x60] sm:$0x3] %v1405
                %v1407 = vld [vmem:[%s1379 + $0x1a] sm:$0x3]
                %1408 = vst [vmem:[%s1380 + $0x68] sm:$0x3] %v1407
                %v1409 = vld [vmem:[%s1379 + $0x1c] sm:$0x3]
                %1410 = vst [vmem:[%s1380 + $0x70] sm:$0x3] %v1409
                %v1411 = vld [vmem:[%s1379 + $0x1e] sm:$0x3]
                %1412 = vst [vmem:[%s1380 + $0x78] sm:$0x3] %v1411
                %v1413 = vld [vmem:[%s1379 + $0x20] sm:$0x3]
                %1414 = vst [vmem:[%s1380 + $0x80] sm:$0x3] %v1413
                %v1415 = vld [vmem:[%s1379 + $0x22] sm:$0x3]
                %1416 = vst [vmem:[%s1380 + $0x88] sm:$0x3] %v1415
                %v1417 = vld [vmem:[%s1379 + $0x24] sm:$0x3]
                %1418 = vst [vmem:[%s1380 + $0x90] sm:$0x3] %v1417
                %v1419 = vld [vmem:[%s1379 + $0x26] sm:$0x3]
                %1420 = vst [vmem:[%s1380 + $0x98] sm:$0x3] %v1419
                %v1421 = vld [vmem:[%s1379 + $0x28] sm:$0x3]
                %1422 = vst [vmem:[%s1380 + $0xa0] sm:$0x3] %v1421
                %v1423 = vld [vmem:[%s1379 + $0x2a] sm:$0x3]
                %1424 = vst [vmem:[%s1380 + $0xa8] sm:$0x3] %v1423
                %v1425 = vld [vmem:[%s1379 + $0x2c] sm:$0x3]
                %1426 = vst [vmem:[%s1380 + $0xb0] sm:$0x3] %v1425
                %v1427 = vld [vmem:[%s1379 + $0x2e] sm:$0x3]
                %1428 = vst [vmem:[%s1380 + $0xb8] sm:$0x3] %v1427
                %v1429 = vld [vmem:[%s1379 + $0x30] sm:$0x3]
                %1430 = vst [vmem:[%s1380 + $0xc0] sm:$0x3] %v1429
                %v1431 = vld [vmem:[%s1379 + $0x32] sm:$0x3]
                %1432 = vst [vmem:[%s1380 + $0xc8] sm:$0x3] %v1431
                %v1433 = vld [vmem:[%s1379 + $0x34] sm:$0x3]
                %1434 = vst [vmem:[%s1380 + $0xd0] sm:$0x3] %v1433
                %v1435 = vld [vmem:[%s1379 + $0x36] sm:$0x3]
                %1436 = vst [vmem:[%s1380 + $0xd8] sm:$0x3] %v1435
                %v1437 = vld [vmem:[%s1379 + $0x38] sm:$0x3]
                %1438 = vst [vmem:[%s1380 + $0xe0] sm:$0x3] %v1437
                %v1439 = vld [vmem:[%s1379 + $0x3a] sm:$0x3]
                %1440 = vst [vmem:[%s1380 + $0xe8] sm:$0x3] %v1439
                %v1441 = vld [vmem:[%s1379 + $0x3c] sm:$0x3]
                %1442 = vst [vmem:[%s1380 + $0xf0] sm:$0x3] %v1441
                %v1443 = vld [vmem:[%s1379 + $0x3e] sm:$0x3]
                %1444 = vst [vmem:[%s1380 + $0xf8] sm:$0x3] %v1443
              $region95: #{final_patch_expansion.1} parent=89 // loop_footer
                %s1378 = sadd.s32 1, %s1374
              $region96: #{final_patch_expansion.1} parent=89 // loop_footer_branch
                %1373 = sbr.rel target = $region92
              $region97: #{final_patch_expansion.1} parent=89 // loop_exit
                _
            $region90: #{final_patch_expansion.1} parent=81 // pred_fallthru
              _
          $region82: #{final_patch_expansion.1} parent=77 // pred_fallthru
            _
          %1528 = vnop
        $region78: #{final_patch_expansion.1} parent=69 // pred_fallthru
          _
      $region70: #{final_patch_expansion.1} parent=5 // pred_fallthru
        _
      %p1529 = scmp.le.s32.totalorder 2, %s10
      // Predicated region
      $region116: #{final_patch_expansion.1} parent=5 // pred_check
        %p1530 = pneg %p1529
      $region117: #{final_patch_expansion.1} parent=5 // pred_check_branch
        %1532 = sbr.rel (%p1530) target = $region119
      $region118: #{final_patch_expansion.1} parent=5 // pred_region
        %s1533 = ssub.s32 %s10, 2
        // Predicated region
        $region120: #{final_patch_expansion.1} parent=118 // pred_check
          %p1534 = pneg %p144
        $region121: #{final_patch_expansion.1} parent=118 // pred_check_branch
          %1536 = sbr.rel (%p1534) target = $region123
        $region122: #{final_patch_expansion.1} parent=118 // pred_region
          %s1537 = sand.u32 %s129, 1
          %s1538 = sand.u32 %s129, 1
          %s1539 = smul.addr %s1538, 64
          %s1540 = scalar_lea.vmem [#allocation3], %s1539
        $region123: #{final_patch_expansion.1} parent=118 // pred_fallthru
          _
      $region119: #{final_patch_expansion.1} parent=5 // pred_fallthru
        _
    $region6: #{final_patch_expansion.1} parent=1 // loop_footer
      %s14 = sadd.s32 1, %s10
    $region7: #{final_patch_expansion.1} parent=1 // loop_footer_branch
      %9 = sbr.rel target = $region3
    $region8: #{final_patch_expansion.1} parent=1 // loop_exit
      _

</llo_original>
